<compile_context>
chip_gen: v5e
topology: v5e:2x2
jax: 0.10.0
libtpu: 0.0.40
codegen_flags: <defaults>
</compile_context>

<pallas_src>
import jax
import jax.numpy as jnp
from jax.experimental import pallas as pl
from jax.experimental.pallas import tpu as pltpu


# ---------------------------------------------------------------------------
# Chip-aware VMEM budgets (trace-time query, conservative v7x-sized fallback)
# ---------------------------------------------------------------------------
def _tpu_vmem_capacity_bytes():
    try:
        return int(pltpu.get_tpu_info().vmem_capacity_bytes)
    except Exception:
        return 64 * 1024 * 1024          # v7x per-TC size = safest assumption


_VMEM_CAP = _tpu_vmem_capacity_bytes()
# Double-buffered im2col-tap tile budget (~1/4 of VMEM) and scoped-VMEM limit
# (~1/2):  v5e/v6e (128 MiB) -> 32 MiB tiles / 64 MiB limit (conv2 TM = 2048);
#          v7x (64 MiB/TC)   -> 16 MiB tiles / 32 MiB limit (conv2 TM = 1280).
_TAP_TILE_BUDGET = min(_VMEM_CAP // 4, 32 * 1024 * 1024)
_VMEM_LIMIT_BYTES = max(32 * 1024 * 1024, min(_VMEM_CAP // 2, 64 * 1024 * 1024))


def _m_axis_semantics(num_tiles):
    """v7x needs CORE_PARALLEL to split the M grid across its 2 TensorCores;
    plain 'parallel'/'arbitrary' barely change codegen.  v5e/v6e have 1 TC."""
    try:
        kind = jax.devices()[0].device_kind.lower()
    except Exception:
        kind = ""
    if "v7" in kind and num_tiles >= 2:
        return (pltpu.CORE_PARALLEL,)
    return ("parallel",)


def _pick_tile_m(M, T, K, elem_bytes=2, tm_cap=4096):
    """Pick the lane tile TM and padded extent M_pad.

    TM is sized so that 2 pipeline buffers of the (T, K, TM) bf16 tap operand
    fit the VMEM budget, preferring (a) a single full-width tile for small M
    (block == full dim, no padding copy), then (b) a multiple-of-128 divisor of
    M (no padding copy), then (c) a padded fallback.
    """
    per_lane = 2 * T * K * elem_bytes                 # 2 buffers, bf16 taps
    cap = min(tm_cap, max(128, _TAP_TILE_BUDGET // per_lane))
    cap = (cap // 128) * 128
    if M <= cap:
        return M, M                                    # single tile, no pad
    tm = cap
    while tm >= 128 and M % tm != 0:
        tm -= 128
    if tm >= 128:
        return tm, M                                   # exact divisor, no pad
    tm = cap
    return tm, ((M + tm - 1) // tm) * tm               # rare fallback: pad


# ---------------------------------------------------------------------------
# Pallas kernel: fused multi-tap matmul -> max over taps -> +bias -> ReLU
# ---------------------------------------------------------------------------
def fused_matmul_pool_relu_kernel(w_ref, b_ref, a_ref, o_ref):
    """o = relu(max_t(w @ a[t]) + b); f32 accumulation, cast on store.

    w_ref: (Cout, K)  bf16 -- weight (resident across the M grid)
    b_ref: (Cout, 1)  f32  -- bias, broadcast over lanes
    a_ref: (T, K, TM) bf16 -- T pool taps of the transposed im2col tile
    o_ref: (Cout, TM) bf16/f32 -- lane-dense output tile
    """
    w = w_ref[...]
    z = [jnp.dot(w, a_ref[t], preferred_element_type=jnp.float32)
         for t in range(a_ref.shape[0])]
    # Tree-reduce the tap max so later MXU pops overlap earlier VPU maxes.
    while len(z) > 1:
        z = [jnp.maximum(z[i], z[i + 1]) for i in range(0, len(z) - 1, 2)] + \
            ([z[-1]] if len(z) % 2 else [])
    o_ref[...] = jnp.maximum(z[0] + b_ref[...], 0.0).astype(o_ref.dtype)


def fused_matmul_pool_relu(wT, b, AT, *, out_dtype=jnp.bfloat16):
    """wT: (Cout, K) bf16; b: (Cout,) f32; AT: (T, K, M) bf16
    -> relu(max_t(wT @ AT[t]) + b): (Cout, M) in out_dtype."""
    T, K, M = AT.shape
    Cout = wT.shape[0]

    # Inputs arrive bf16 from the glue / params; these casts are no-ops then.
    AT = AT.astype(jnp.bfloat16)
    wT = wT.astype(jnp.bfloat16)
    b2 = b.reshape(Cout, 1).astype(jnp.float32)

    tm, m_pad = _pick_tile_m(M, T, K)
    if m_pad != M:                       # rare: only when no 128-divisor of M fits
        AT = jnp.pad(AT, ((0, 0), (0, 0), (0, m_pad - M)))
    num_tiles = m_pad // tm

    flops = 2 * m_pad * K * Cout * T
    bytes_accessed = (AT.size * 2 + wT.size * 2 + b2.size * 4
                      + Cout * m_pad * jnp.dtype(out_dtype).itemsize)

    out = pl.pallas_call(
        fused_matmul_pool_relu_kernel,
        out_shape=jax.ShapeDtypeStruct((Cout, m_pad), out_dtype),
        grid=(num_tiles,),
        in_specs=[
            pl.BlockSpec((Cout, K), lambda i: (0, 0)),       # weight resident
            pl.BlockSpec((Cout, 1), lambda i: (0, 0)),       # bias resident
            pl.BlockSpec((T, K, tm), lambda i: (0, 0, i)),   # taps, tiled over M
        ],
        out_specs=pl.BlockSpec((Cout, tm), lambda i: (0, i)),
        compiler_params=pltpu.CompilerParams(
            dimension_semantics=_m_axis_semantics(num_tiles),
            vmem_limit_bytes=_VMEM_LIMIT_BYTES,
        ),
        cost_estimate=pl.CostEstimate(
            flops=flops, transcendentals=0, bytes_accessed=bytes_accessed),
    )(wT, b2, AT)
    return out[:, :M]


# ---------------------------------------------------------------------------
# Glue: pooled im2col on a channel-major feature map (data movement only)
# ---------------------------------------------------------------------------
def pooled_im2col_cmajor(xc, K):
    """xc: (C, N, H, W) channel-major -> taps (4, K*K*C, N*PH*PW), (PH, PW).

    K-dim row order is (kh, kw, cin); columns are (n, ph, pw).  Tap t = 2*dy+dx
    is conv-output position (2*ph+dy, 2*pw+dx), so max over t == 2x2 max-pool.
    Consuming the kernels' native channel-major output avoids any inter-layer
    transpose, and all intermediates stay bf16.
    """
    C, N, H, W = xc.shape
    OH, OW = H - K + 1, W - K + 1
    PH, PW = OH // 2, OW // 2
    slabs = jnp.stack(
        [xc[:, :, kh:kh + OH, kw:kw + OW] for kh in range(K) for kw in range(K)],
        axis=0)                                                  # (K*K, C, N, OH, OW)
    taps = jnp.stack(
        [slabs[:, :, :, dy:dy + 2 * PH:2, dx:dx + 2 * PW:2]
         for dy in range(2) for dx in range(2)], axis=0)         # (4, K*K, C, N, PH, PW)
    return taps.reshape(4, K * K * C, N * PH * PW), (PH, PW)


# ---------------------------------------------------------------------------
# Parameters (PyTorch conventions; MXU operands pre-flattened to bf16 at init)
# ---------------------------------------------------------------------------
def init_params(key, num_channels=1, num_classes=10):
    k1, k2, k3, k4, k5, k6 = jax.random.split(key, 6)
    # PyTorch layouts: conv weights OIHW, linear weight (out_features, in_features).
    w1 = jax.random.normal(k1, (32, num_channels, 5, 5), jnp.float32) * 0.1
    b1 = jax.random.normal(k2, (32,), jnp.float32) * 0.1
    w2 = jax.random.normal(k3, (64, 32, 5, 5), jnp.float32) * 0.05
    b2 = jax.random.normal(k4, (64,), jnp.float32) * 0.05
    wfc = jax.random.normal(k5, (num_classes, 4 * 4 * 64), jnp.float32) * 0.02
    bfc = jax.random.normal(k6, (num_classes,), jnp.float32) * 0.02
    # OIHW -> (Cout, kh*kw*cin), bf16 once at init (matches im2col row order).
    kernel_params = {
        "w1t": jnp.transpose(w1, (0, 2, 3, 1)).reshape(32, -1).astype(jnp.bfloat16),
        "b1": b1,
        "w2t": jnp.transpose(w2, (0, 2, 3, 1)).reshape(64, -1).astype(jnp.bfloat16),
        "b2": b2,
        "wfc": wfc.astype(jnp.bfloat16),     # (out, in) is already swapped layout
        "bfc": bfc,
    }
    torch_params = {"w1": w1, "b1": b1, "w2": w2, "b2": b2, "wfc": wfc, "bfc": bfc}
    return kernel_params, torch_params


# ---------------------------------------------------------------------------
# Forward pass (inference semantics of CNNMnist2)
# ---------------------------------------------------------------------------
def cnn_mnist2_forward(x_nchw, params):
    """x_nchw: (N, C, 28, 28) float32 -> (N, num_classes) float32."""
    N = x_nchw.shape[0]
    # bf16 + channel-major (C, N, H, W) up front: every glue intermediate is
    # half-size and no inter-layer transposes are needed.
    xc = jnp.transpose(x_nchw.astype(jnp.bfloat16), (1, 0, 2, 3))

    # x = relu(max_pool2d(conv1(x), 2))           (fused conv+pool+relu)
    A1, (ph1, pw1) = pooled_im2col_cmajor(xc, 5)                    # (4, 25*C, N*144)
    y1 = fused_matmul_pool_relu(params["w1t"], params["b1"], A1)    # (32, N*144) bf16
    f1 = y1.reshape(32, N, ph1, pw1)              # channel-major, no transpose/copy

    # x = relu(max_pool2d(conv2_drop(conv2(x)), 2))   (Dropout2d = identity @ eval)
    A2, (ph2, pw2) = pooled_im2col_cmajor(f1, 5)                    # (4, 800, N*16)
    y2 = fused_matmul_pool_relu(params["w2t"], params["b2"], A2)    # (64, N*16) bf16

    # x = x.view(-1, C*H*W): channel-major -> NCHW flatten (tiny bf16 transpose)
    flat = jnp.transpose(y2.reshape(64, N, ph2 * pw2), (1, 0, 2)).reshape(
        N, 64 * ph2 * pw2)

    # x = F.dropout(x) -> identity at inference;  x = relu(fc1(x))
    if N >= 128:
        A3 = flat.T[None]                                           # (1, 1024, N)
        out = fused_matmul_pool_relu(params["wfc"], params["bfc"], A3,
                                     out_dtype=jnp.float32).T       # (N, classes)
    else:
        # Tiny-batch GEMV: a (10, 128-lane-padded) Pallas tile would be >90%
        # padding, so let XLA do it (still bf16 inputs, f32 accumulation).
        out = jnp.maximum(
            jnp.dot(flat, params["wfc"].T, preferred_element_type=jnp.float32)
            + params["bfc"][None, :], 0.0)
    return out


# ---------------------------------------------------------------------------
# Pure-XLA f32 reference (PyTorch semantics) for a tolerance check
# ---------------------------------------------------------------------------
def reference_forward(x, p):
    def conv(x, w, b):
        y = jax.lax.conv_general_dilated(
            x, w, window_strides=(1, 1), padding="VALID",
            dimension_numbers=("NCHW", "OIHW", "NCHW"))
        return y + b[None, :, None, None]

    def pool2(x):
        return jax.lax.reduce_window(x, -jnp.inf, jax.lax.max,
                                     (1, 1, 2, 2), (1, 1, 2, 2), "VALID")

    y = jnp.maximum(pool2(conv(x, p["w1"], p["b1"])), 0.0)
    y = jnp.maximum(pool2(conv(y, p["w2"], p["b2"])), 0.0)
    y = y.reshape(y.shape[0], -1)
    return jnp.maximum(y @ p["wfc"].T + p["bfc"][None, :], 0.0)


if __name__ == "__main__":
    key = jax.random.PRNGKey(0)
    pkey, xkey = jax.random.split(key)

    num_channels, num_classes, batch = 1, 10, 2
    params, torch_params = init_params(pkey, num_channels=num_channels,
                                       num_classes=num_classes)

    # fc1 expects 4*4*64 features -> input spatial must be 28x28 (MNIST).
    x = jax.random.normal(xkey, (batch, num_channels, 28, 28), jnp.float32)

    fwd = jax.jit(cnn_mnist2_forward)
    out = jax.block_until_ready(fwd(x, params))
    ref = reference_forward(x, torch_params)

    assert out.shape == (batch, num_classes)
    assert bool(jnp.all(out >= 0.0))                     # final ReLU
    # bf16 MXU inputs with f32 accumulation: tolerance-check, not exact match.
    assert bool(jnp.allclose(out, ref, atol=0.1, rtol=0.1)), \
        float(jnp.max(jnp.abs(out - ref)))
    print("KERNEL_OK")
</pallas_src>

<mosaic_0001>
module attributes {stable_mosaic.version = 11 : i64} {
  func.func @fused_matmul_pool_relu_kernel(%arg0: i32, %arg1: memref<32x25xbf16, #tpu.memory_space<vmem>>, %arg2: memref<32x1xf32, #tpu.memory_space<vmem>>, %arg3: memref<4x25x288xbf16, #tpu.memory_space<vmem>>, %arg4: memref<32x288xbf16, #tpu.memory_space<vmem>>) attributes {dimension_semantics = [#tpu.dimension_semantics<parallel>], iteration_bounds = array<i64: 1>, scalar_prefetch = 0 : i64, scratch_operands = 0 : i64, tpu.core_type = #tpu.core_type<tc>, window_params = [{pipeline_mode = #tpu.pipeline_mode<synchronous>, transform_indices = @transform_0, window_bounds = array<i64: 32, 25>}, {pipeline_mode = #tpu.pipeline_mode<synchronous>, transform_indices = @transform_1, window_bounds = array<i64: 32, 1>}, {transform_indices = @transform_2, window_bounds = array<i64: 4, 25, 288>}, {transform_indices = @transform_3, window_bounds = array<i64: 32, 288>}]} {
    %c0 = arith.constant 0 : index
    %c0_0 = arith.constant 0 : index
    %0 = vector.load %arg1[%c0, %c0_0] : memref<32x25xbf16, #tpu.memory_space<vmem>>, vector<32x25xbf16>
    %c0_1 = arith.constant 0 : index
    %c0_2 = arith.constant 0 : index
    %c0_3 = arith.constant 0 : index
    %1 = vector.load %arg3[%c0_1, %c0_2, %c0_3] : memref<4x25x288xbf16, #tpu.memory_space<vmem>>, vector<1x25x288xbf16>
    %2 = vector.shape_cast %1 : vector<1x25x288xbf16> to vector<25x288xbf16>
    %cst = arith.constant dense<0.000000e+00> : vector<32x288xf32>
    %3 = tpu.matmul %0, %2, %cst {dimension_numbers = #tpu.dot_dimension_numbers<[1], [0], [0], [1], [0, 0, 1, 1], [], []>} : vector<32x25xbf16>, vector<25x288xbf16>, vector<32x288xf32> -> vector<32x288xf32>
    %c1 = arith.constant 1 : index
    %c0_4 = arith.constant 0 : index
    %c0_5 = arith.constant 0 : index
    %4 = vector.load %arg3[%c1, %c0_4, %c0_5] : memref<4x25x288xbf16, #tpu.memory_space<vmem>>, vector<1x25x288xbf16>
    %5 = vector.shape_cast %4 : vector<1x25x288xbf16> to vector<25x288xbf16>
    %cst_6 = arith.constant dense<0.000000e+00> : vector<32x288xf32>
    %6 = tpu.matmul %0, %5, %cst_6 {dimension_numbers = #tpu.dot_dimension_numbers<[1], [0], [0], [1], [0, 0, 1, 1], [], []>} : vector<32x25xbf16>, vector<25x288xbf16>, vector<32x288xf32> -> vector<32x288xf32>
    %c2 = arith.constant 2 : index
    %c0_7 = arith.constant 0 : index
    %c0_8 = arith.constant 0 : index
    %7 = vector.load %arg3[%c2, %c0_7, %c0_8] : memref<4x25x288xbf16, #tpu.memory_space<vmem>>, vector<1x25x288xbf16>
    %8 = vector.shape_cast %7 : vector<1x25x288xbf16> to vector<25x288xbf16>
    %cst_9 = arith.constant dense<0.000000e+00> : vector<32x288xf32>
    %9 = tpu.matmul %0, %8, %cst_9 {dimension_numbers = #tpu.dot_dimension_numbers<[1], [0], [0], [1], [0, 0, 1, 1], [], []>} : vector<32x25xbf16>, vector<25x288xbf16>, vector<32x288xf32> -> vector<32x288xf32>
    %c3 = arith.constant 3 : index
    %c0_10 = arith.constant 0 : index
    %c0_11 = arith.constant 0 : index
    %10 = vector.load %arg3[%c3, %c0_10, %c0_11] : memref<4x25x288xbf16, #tpu.memory_space<vmem>>, vector<1x25x288xbf16>
    %11 = vector.shape_cast %10 : vector<1x25x288xbf16> to vector<25x288xbf16>
    %cst_12 = arith.constant dense<0.000000e+00> : vector<32x288xf32>
    %12 = tpu.matmul %0, %11, %cst_12 {dimension_numbers = #tpu.dot_dimension_numbers<[1], [0], [0], [1], [0, 0, 1, 1], [], []>} : vector<32x25xbf16>, vector<25x288xbf16>, vector<32x288xf32> -> vector<32x288xf32>
    %13 = arith.maximumf %3, %6 : vector<32x288xf32>
    %14 = arith.maximumf %9, %12 : vector<32x288xf32>
    %15 = arith.maximumf %13, %14 : vector<32x288xf32>
    %c0_13 = arith.constant 0 : index
    %c0_14 = arith.constant 0 : index
    %16 = vector.load %arg2[%c0_13, %c0_14] : memref<32x1xf32, #tpu.memory_space<vmem>>, vector<32x1xf32>
    %17 = vector.broadcast %16 : vector<32x1xf32> to vector<32x288xf32>
    %18 = arith.addf %15, %17 : vector<32x288xf32>
    %cst_15 = arith.constant 0.000000e+00 : f32
    %19 = vector.broadcast %cst_15 : f32 to vector<32x288xf32>
    %20 = arith.maximumf %18, %19 : vector<32x288xf32>
    %21 = arith.truncf %20 : vector<32x288xf32> to vector<32x288xbf16>
    %c0_16 = arith.constant 0 : index
    %c0_17 = arith.constant 0 : index
    %22 = vector.load %arg4[%c0_16, %c0_17] : memref<32x288xbf16, #tpu.memory_space<vmem>>, vector<32x288xbf16>
    tpu.vector_store %arg4[%c0_16, %c0_17], %21 {strides = array<i32>} : memref<32x288xbf16, #tpu.memory_space<vmem>>, vector<32x288xbf16>,
    return
  }
  func.func @transform_0(%arg0: i32) -> (i32, i32) {
    %c0_i32 = arith.constant 0 : i32
    %c0_i32_0 = arith.constant 0 : i32
    %c0_i32_1 = arith.constant 0 : i32
    return %c0_i32, %c0_i32_0 : i32, i32
  }
  func.func @transform_1(%arg0: i32) -> (i32, i32) {
    %c0_i32 = arith.constant 0 : i32
    %c0_i32_0 = arith.constant 0 : i32
    %c0_i32_1 = arith.constant 0 : i32
    return %c0_i32, %c0_i32_0 : i32, i32
  }
  func.func @transform_2(%arg0: i32) -> (i32, i32, i32) {
    %c0_i32 = arith.constant 0 : i32
    %c0_i32_0 = arith.constant 0 : i32
    %c0_i32_1 = arith.constant 0 : i32
    return %c0_i32, %c0_i32_0, %arg0 : i32, i32, i32
  }
  func.func @transform_3(%arg0: i32) -> (i32, i32) {
    %c0_i32 = arith.constant 0 : i32
    %c0_i32_0 = arith.constant 0 : i32
    return %c0_i32, %arg0 : i32, i32
  }
}

module attributes {stable_mosaic.version = 11 : i64} {
  func.func @fused_matmul_pool_relu_kernel(%arg0: i32, %arg1: memref<64x800xbf16, #tpu.memory_space<vmem>>, %arg2: memref<64x1xf32, #tpu.memory_space<vmem>>, %arg3: memref<4x800x32xbf16, #tpu.memory_space<vmem>>, %arg4: memref<64x32xbf16, #tpu.memory_space<vmem>>) attributes {dimension_semantics = [#tpu.dimension_semantics<parallel>], iteration_bounds = array<i64: 1>, scalar_prefetch = 0 : i64, scratch_operands = 0 : i64, tpu.core_type = #tpu.core_type<tc>, window_params = [{pipeline_mode = #tpu.pipeline_mode<synchronous>, transform_indices = @transform_0, window_bounds = array<i64: 64, 800>}, {pipeline_mode = #tpu.pipeline_mode<synchronous>, transform_indices = @transform_1, window_bounds = array<i64: 64, 1>}, {transform_indices = @transform_2, window_bounds = array<i64: 4, 800, 32>}, {transform_indices = @transform_3, window_bounds = array<i64: 64, 32>}]} {
    %c0 = arith.constant 0 : index
    %c0_0 = arith.constant 0 : index
    %0 = vector.load %arg1[%c0, %c0_0] : memref<64x800xbf16, #tpu.memory_space<vmem>>, vector<64x800xbf16>
    %c0_1 = arith.constant 0 : index
    %c0_2 = arith.constant 0 : index
    %c0_3 = arith.constant 0 : index
    %1 = vector.load %arg3[%c0_1, %c0_2, %c0_3] : memref<4x800x32xbf16, #tpu.memory_space<vmem>>, vector<1x800x32xbf16>
    %2 = vector.shape_cast %1 : vector<1x800x32xbf16> to vector<800x32xbf16>
    %cst = arith.constant dense<0.000000e+00> : vector<64x32xf32>
    %3 = tpu.matmul %0, %2, %cst {dimension_numbers = #tpu.dot_dimension_numbers<[1], [0], [0], [1], [0, 0, 1, 1], [], []>} : vector<64x800xbf16>, vector<800x32xbf16>, vector<64x32xf32> -> vector<64x32xf32>
    %c1 = arith.constant 1 : index
    %c0_4 = arith.constant 0 : index
    %c0_5 = arith.constant 0 : index
    %4 = vector.load %arg3[%c1, %c0_4, %c0_5] : memref<4x800x32xbf16, #tpu.memory_space<vmem>>, vector<1x800x32xbf16>
    %5 = vector.shape_cast %4 : vector<1x800x32xbf16> to vector<800x32xbf16>
    %cst_6 = arith.constant dense<0.000000e+00> : vector<64x32xf32>
    %6 = tpu.matmul %0, %5, %cst_6 {dimension_numbers = #tpu.dot_dimension_numbers<[1], [0], [0], [1], [0, 0, 1, 1], [], []>} : vector<64x800xbf16>, vector<800x32xbf16>, vector<64x32xf32> -> vector<64x32xf32>
    %c2 = arith.constant 2 : index
    %c0_7 = arith.constant 0 : index
    %c0_8 = arith.constant 0 : index
    %7 = vector.load %arg3[%c2, %c0_7, %c0_8] : memref<4x800x32xbf16, #tpu.memory_space<vmem>>, vector<1x800x32xbf16>
    %8 = vector.shape_cast %7 : vector<1x800x32xbf16> to vector<800x32xbf16>
    %cst_9 = arith.constant dense<0.000000e+00> : vector<64x32xf32>
    %9 = tpu.matmul %0, %8, %cst_9 {dimension_numbers = #tpu.dot_dimension_numbers<[1], [0], [0], [1], [0, 0, 1, 1], [], []>} : vector<64x800xbf16>, vector<800x32xbf16>, vector<64x32xf32> -> vector<64x32xf32>
    %c3 = arith.constant 3 : index
    %c0_10 = arith.constant 0 : index
    %c0_11 = arith.constant 0 : index
    %10 = vector.load %arg3[%c3, %c0_10, %c0_11] : memref<4x800x32xbf16, #tpu.memory_space<vmem>>, vector<1x800x32xbf16>
    %11 = vector.shape_cast %10 : vector<1x800x32xbf16> to vector<800x32xbf16>
    %cst_12 = arith.constant dense<0.000000e+00> : vector<64x32xf32>
    %12 = tpu.matmul %0, %11, %cst_12 {dimension_numbers = #tpu.dot_dimension_numbers<[1], [0], [0], [1], [0, 0, 1, 1], [], []>} : vector<64x800xbf16>, vector<800x32xbf16>, vector<64x32xf32> -> vector<64x32xf32>
    %13 = arith.maximumf %3, %6 : vector<64x32xf32>
    %14 = arith.maximumf %9, %12 : vector<64x32xf32>
    %15 = arith.maximumf %13, %14 : vector<64x32xf32>
    %c0_13 = arith.constant 0 : index
    %c0_14 = arith.constant 0 : index
    %16 = vector.load %arg2[%c0_13, %c0_14] : memref<64x1xf32, #tpu.memory_space<vmem>>, vector<64x1xf32>
    %17 = vector.broadcast %16 : vector<64x1xf32> to vector<64x32xf32>
    %18 = arith.addf %15, %17 : vector<64x32xf32>
    %cst_15 = arith.constant 0.000000e+00 : f32
    %19 = vector.broadcast %cst_15 : f32 to vector<64x32xf32>
    %20 = arith.maximumf %18, %19 : vector<64x32xf32>
    %21 = arith.truncf %20 : vector<64x32xf32> to vector<64x32xbf16>
    %c0_16 = arith.constant 0 : index
    %c0_17 = arith.constant 0 : index
    %22 = vector.load %arg4[%c0_16, %c0_17] : memref<64x32xbf16, #tpu.memory_space<vmem>>, vector<64x32xbf16>
    tpu.vector_store %arg4[%c0_16, %c0_17], %21 {strides = array<i32>} : memref<64x32xbf16, #tpu.memory_space<vmem>>, vector<64x32xbf16>,
    return
  }
  func.func @transform_0(%arg0: i32) -> (i32, i32) {
    %c0_i32 = arith.constant 0 : i32
    %c0_i32_0 = arith.constant 0 : i32
    %c0_i32_1 = arith.constant 0 : i32
    return %c0_i32, %c0_i32_0 : i32, i32
  }
  func.func @transform_1(%arg0: i32) -> (i32, i32) {
    %c0_i32 = arith.constant 0 : i32
    %c0_i32_0 = arith.constant 0 : i32
    %c0_i32_1 = arith.constant 0 : i32
    return %c0_i32, %c0_i32_0 : i32, i32
  }
  func.func @transform_2(%arg0: i32) -> (i32, i32, i32) {
    %c0_i32 = arith.constant 0 : i32
    %c0_i32_0 = arith.constant 0 : i32
    %c0_i32_1 = arith.constant 0 : i32
    return %c0_i32, %c0_i32_0, %arg0 : i32, i32, i32
  }
  func.func @transform_3(%arg0: i32) -> (i32, i32) {
    %c0_i32 = arith.constant 0 : i32
    %c0_i32_0 = arith.constant 0 : i32
    return %c0_i32, %arg0 : i32, i32
  }
}

</mosaic_0001>

<llo_original>
// kernel: cnn_mnist2_forward.2
$region0: #{cnn_mnist2_forward.2}
  #allocation0 [shape = 'u32[]', space=smem, size = 0x4, offset = 0x4, fixed_abs, tag = 'smem constant byte address 0x4 - core index']
  #allocation1 [shape = 'u32[72,128]{1,0:T(1,128)}', space=vmem, size = 0x9000, scoped, tag = 'internal scratch']
  %s0 = inlined_call_operand.vmem [shape: bf16[32,25], index: 0, kind: input, shape index: {}]
  %s1 = inlined_call_operand.vmem [shape: f32[32,1], index: 1, kind: input, shape index: {}]
  %s2 = inlined_call_operand.vmem [shape: bf16[4,25,288], index: 2, kind: input, shape index: {}]
  %s3 = inlined_call_operand.vmem [shape: bf16[32,288], index: 3, kind: output, shape index: {}]
  %s4 = sld [smem:[#allocation0]]
  $region22: #{cnn_mnist2_forward.2} parent=0
    _
  %s6 = ssub.s32 1, %s4
  %s7 = scalar_select 0, %s6, %s4
  // Predicated region
  $region2: #{cnn_mnist2_forward.2} parent=0 // pred_check
    _
  $region3: #{cnn_mnist2_forward.2} parent=0 // pred_check_branch
    %9 = sbr.rel (0) target = $region5
  $region4: #{cnn_mnist2_forward.2} parent=0 // pred_region
    _
  $region5: #{cnn_mnist2_forward.2} parent=0 // pred_fallthru
    _
  // Predicated region
  $region6: #{cnn_mnist2_forward.2} parent=0 // pred_check
    _
  $region7: #{cnn_mnist2_forward.2} parent=0 // pred_check_branch
    %11 = sbr.rel (0) target = $region9
  $region8: #{cnn_mnist2_forward.2} parent=0 // pred_region
    _
  $region9: #{cnn_mnist2_forward.2} parent=0 // pred_fallthru
    _
  // Predicated region
  $region10: #{cnn_mnist2_forward.2} parent=0 // pred_check
    _
  $region11: #{cnn_mnist2_forward.2} parent=0 // pred_check_branch
    %13 = sbr.rel (0) target = $region13
  $region12: #{cnn_mnist2_forward.2} parent=0 // pred_region
    _
  $region13: #{cnn_mnist2_forward.2} parent=0 // pred_fallthru
    _
  %v15 = vld [vmem:[%s0] sm:$0xf]
  %v16 = vld [vmem:[%s0 + $0x4] sm:$0xf]
  %v17 = vld [vmem:[%s0 + $0x8] sm:$0xf]
  %v18 = vld [vmem:[%s0 + $0xc] sm:$0xf]
  %v19 = vld [vmem:[%s2] sm:$0xff]
  %v20 = vld [vmem:[%s2 + $0x8] sm:$0xf]
  %v21 = vld [vmem:[%s2 + $0xc] sm:$0xff]
  %v22 = vld [vmem:[%s2 + $0x14] sm:$0xf]
  %v23 = vld [vmem:[%s2 + $0x18] sm:$0xff]
  %v24 = vld [vmem:[%s2 + $0x20] sm:$0xf]
  %v25 = vld [vmem:[%s2 + $0x24] sm:$0x11]
  %v26 = vld [vmem:[%s2 + $0x2c] sm:$0x1]
  %v31 = vunpack.c.l.b16 %v15
  %v32 = vunpack.c.l.b16 %v16
  %v33 = vunpack.c.l.b16 %v17
  %v34 = vunpack.c.l.b16 %v18
  %v35 = vpack.c.b16 %v32, %v31
  %v36 = vpack.c.b16 %v34, %v33
  %v45 = vunpack.c.l.b16 %v19
  %v46 = vunpack.c.h.b16 %v19
  %v47 = vunpack.c.l.b16 %v20
  %v48 = vunpack.c.l.b16 %v21
  %v49 = vunpack.c.h.b16 %v21
  %v50 = vunpack.c.l.b16 %v22
  %v51 = vunpack.c.l.b16 %v23
  %v52 = vunpack.c.h.b16 %v23
  %v53 = vunpack.c.l.b16 %v24
  %v54 = vunpack.c.l.b16 %v25
  %v55 = vunpack.c.h.b16 %v25
  %v56 = vunpack.c.l.b16 %v26
  %v57 = vpack.c.b16 %v48, %v45
  %v58 = vpack.c.b16 %v49, %v46
  %v59 = vpack.c.b16 %v50, %v47
  %v60 = vpack.c.b16 %v54, %v51
  %v61 = vpack.c.b16 %v55, %v52
  %v62 = vpack.c.b16 %v56, %v53
  %vm66 = vcmask 203776
  %v68 = vsel %vm66, %v35, 0
  %v71 = vsel %vm66, %v36, 0
  %vm73 = vcmask 1043456
  %vm74 = vcmask 1044480
  %v75 = vsel %vm73, 4294967295, 65535
  %v76 = vsel %vm74, %v75, 0
  %v78 = vand.u32 %v60, %v76
  %v81 = vand.u32 %v61, %v76
  %v84 = vand.u32 %v62, %v76
  %86 = vmatpush.bf16.msra.mxu0 0
  %87 = vmatpush.bf16.msra.mxu0 0
  %88 = vmatpush.bf16.msra.mxu0 0
  %89 = vmatpush.bf16.msra.mxu0 0
  %90 = vmatpush.bf16.msra.mxu0 0
  %91 = vmatpush.bf16.msra.mxu0 0
  %92 = vmatpush.bf16.msra.mxu0 %v78
  %93 = vmatpush.bf16.msra.mxu0 %v57
  %94 = vmatmul.bf16.gmra.mxu0 %v68
  %v95 = vpop.f32.mrf.mxu0
  %v96 = vadd.f32 0.0, %v95
  %v97 = vpop.f32.mrf.mxu0
  %v98 = vadd.f32 0.0, %v97
  %99 = vmatmul.bf16.gmra.mxu0 %v71
  %v100 = vpop.f32.mrf.mxu0
  %v101 = vadd.f32 0.0, %v100
  %v102 = vpop.f32.mrf.mxu0
  %v103 = vadd.f32 0.0, %v102
  %104 = vdwg.mxu0
  %105 = vmatpush.bf16.msra.mxu0 0
  %106 = vmatpush.bf16.msra.mxu0 0
  %107 = vmatpush.bf16.msra.mxu0 0
  %108 = vmatpush.bf16.msra.mxu0 0
  %109 = vmatpush.bf16.msra.mxu0 0
  %110 = vmatpush.bf16.msra.mxu0 0
  %111 = vmatpush.bf16.msra.mxu0 %v81
  %112 = vmatpush.bf16.msra.mxu0 %v58
  %113 = vmatmul.bf16.gmra.mxu0 %v68
  %v114 = vpop.f32.mrf.mxu0
  %v115 = vadd.f32 0.0, %v114
  %v116 = vpop.f32.mrf.mxu0
  %v117 = vadd.f32 0.0, %v116
  %118 = vmatmul.bf16.gmra.mxu0 %v71
  %v119 = vpop.f32.mrf.mxu0
  %v120 = vadd.f32 0.0, %v119
  %v121 = vpop.f32.mrf.mxu0
  %v122 = vadd.f32 0.0, %v121
  %123 = vdwg.mxu0
  %124 = vmatpush.bf16.msra.mxu0 0
  %125 = vmatpush.bf16.msra.mxu0 0
  %126 = vmatpush.bf16.msra.mxu0 0
  %127 = vmatpush.bf16.msra.mxu0 0
  %128 = vmatpush.bf16.msra.mxu0 0
  %129 = vmatpush.bf16.msra.mxu0 0
  %130 = vmatpush.bf16.msra.mxu0 %v84
  %131 = vmatpush.bf16.msra.mxu0 %v59
  %132 = vmatmul.bf16.gmra.mxu0 %v68
  %v133 = vpop.f32.mrf.mxu0
  %v134 = vadd.f32 0.0, %v133
  %v135 = vpop.f32.mrf.mxu0
  %v136 = vadd.f32 0.0, %v135
  %137 = vmatmul.bf16.gmra.mxu0 %v71
  %v138 = vpop.f32.mrf.mxu0
  %v139 = vadd.f32 0.0, %v138
  %v140 = vpop.f32.mrf.mxu0
  %v141 = vadd.f32 0.0, %v140
  %142 = vdwg.mxu0
  %s143 = scalar_lea.vmem %s2, 48
  %v144 = vld [vmem:[%s143] sm:$0xff]
  %v145 = vld [vmem:[%s143 + $0x8] sm:$0xf]
  %v146 = vld [vmem:[%s143 + $0xc] sm:$0xff]
  %v147 = vld [vmem:[%s143 + $0x14] sm:$0xf]
  %v148 = vld [vmem:[%s143 + $0x18] sm:$0xff]
  %v149 = vld [vmem:[%s143 + $0x20] sm:$0xf]
  %v150 = vld [vmem:[%s143 + $0x24] sm:$0x11]
  %v151 = vld [vmem:[%s143 + $0x2c] sm:$0x1]
  %v160 = vunpack.c.l.b16 %v144
  %v161 = vunpack.c.h.b16 %v144
  %v162 = vunpack.c.l.b16 %v145
  %v163 = vunpack.c.l.b16 %v146
  %v164 = vunpack.c.h.b16 %v146
  %v165 = vunpack.c.l.b16 %v147
  %v166 = vunpack.c.l.b16 %v148
  %v167 = vunpack.c.h.b16 %v148
  %v168 = vunpack.c.l.b16 %v149
  %v169 = vunpack.c.l.b16 %v150
  %v170 = vunpack.c.h.b16 %v150
  %v171 = vunpack.c.l.b16 %v151
  %v172 = vpack.c.b16 %v163, %v160
  %v173 = vpack.c.b16 %v164, %v161
  %v174 = vpack.c.b16 %v165, %v162
  %v175 = vpack.c.b16 %v169, %v166
  %v176 = vpack.c.b16 %v170, %v167
  %v177 = vpack.c.b16 %v171, %v168
  %v182 = vand.u32 %v175, %v76
  %v185 = vand.u32 %v176, %v76
  %v188 = vand.u32 %v177, %v76
  %190 = vmatpush.bf16.msra.mxu0 0
  %191 = vmatpush.bf16.msra.mxu0 0
  %192 = vmatpush.bf16.msra.mxu0 0
  %193 = vmatpush.bf16.msra.mxu0 0
  %194 = vmatpush.bf16.msra.mxu0 0
  %195 = vmatpush.bf16.msra.mxu0 0
  %196 = vmatpush.bf16.msra.mxu0 %v182
  %197 = vmatpush.bf16.msra.mxu0 %v172
  %198 = vmatmul.bf16.gmra.mxu0 %v68
  %v199 = vpop.f32.mrf.mxu0
  %v200 = vadd.f32 0.0, %v199
  %v201 = vpop.f32.mrf.mxu0
  %v202 = vadd.f32 0.0, %v201
  %203 = vmatmul.bf16.gmra.mxu0 %v71
  %v204 = vpop.f32.mrf.mxu0
  %v205 = vadd.f32 0.0, %v204
  %v206 = vpop.f32.mrf.mxu0
  %v207 = vadd.f32 0.0, %v206
  %208 = vdwg.mxu0
  %209 = vmatpush.bf16.msra.mxu0 0
  %210 = vmatpush.bf16.msra.mxu0 0
  %211 = vmatpush.bf16.msra.mxu0 0
  %212 = vmatpush.bf16.msra.mxu0 0
  %213 = vmatpush.bf16.msra.mxu0 0
  %214 = vmatpush.bf16.msra.mxu0 0
  %215 = vmatpush.bf16.msra.mxu0 %v185
  %216 = vmatpush.bf16.msra.mxu0 %v173
  %217 = vmatmul.bf16.gmra.mxu0 %v68
  %v218 = vpop.f32.mrf.mxu0
  %v219 = vadd.f32 0.0, %v218
  %v220 = vpop.f32.mrf.mxu0
  %v221 = vadd.f32 0.0, %v220
  %222 = vmatmul.bf16.gmra.mxu0 %v71
  %v223 = vpop.f32.mrf.mxu0
  %v224 = vadd.f32 0.0, %v223
  %v225 = vpop.f32.mrf.mxu0
  %v226 = vadd.f32 0.0, %v225
  %227 = vdwg.mxu0
  %228 = vmatpush.bf16.msra.mxu0 0
  %229 = vmatpush.bf16.msra.mxu0 0
  %230 = vmatpush.bf16.msra.mxu0 0
  %231 = vmatpush.bf16.msra.mxu0 0
  %232 = vmatpush.bf16.msra.mxu0 0
  %233 = vmatpush.bf16.msra.mxu0 0
  %234 = vmatpush.bf16.msra.mxu0 %v188
  %235 = vmatpush.bf16.msra.mxu0 %v174
  %236 = vmatmul.bf16.gmra.mxu0 %v68
  %v237 = vpop.f32.mrf.mxu0
  %v238 = vadd.f32 0.0, %v237
  %v239 = vpop.f32.mrf.mxu0
  %v240 = vadd.f32 0.0, %v239
  %241 = vmatmul.bf16.gmra.mxu0 %v71
  %v242 = vpop.f32.mrf.mxu0
  %v243 = vadd.f32 0.0, %v242
  %v244 = vpop.f32.mrf.mxu0
  %v245 = vadd.f32 0.0, %v244
  %246 = vdwg.mxu0
  %s247 = scalar_lea.vmem %s2, 96
  %v248 = vld [vmem:[%s247] sm:$0xff]
  %v249 = vld [vmem:[%s247 + $0x8] sm:$0xf]
  %v250 = vld [vmem:[%s247 + $0xc] sm:$0xff]
  %v251 = vld [vmem:[%s247 + $0x14] sm:$0xf]
  %v252 = vld [vmem:[%s247 + $0x18] sm:$0xff]
  %v253 = vld [vmem:[%s247 + $0x20] sm:$0xf]
  %v254 = vld [vmem:[%s247 + $0x24] sm:$0x11]
  %v255 = vld [vmem:[%s247 + $0x2c] sm:$0x1]
  %v264 = vunpack.c.l.b16 %v248
  %v265 = vunpack.c.h.b16 %v248
  %v266 = vunpack.c.l.b16 %v249
  %v267 = vunpack.c.l.b16 %v250
  %v268 = vunpack.c.h.b16 %v250
  %v269 = vunpack.c.l.b16 %v251
  %v270 = vunpack.c.l.b16 %v252
  %v271 = vunpack.c.h.b16 %v252
  %v272 = vunpack.c.l.b16 %v253
  %v273 = vunpack.c.l.b16 %v254
  %v274 = vunpack.c.h.b16 %v254
  %v275 = vunpack.c.l.b16 %v255
  %v276 = vpack.c.b16 %v267, %v264
  %v277 = vpack.c.b16 %v268, %v265
  %v278 = vpack.c.b16 %v269, %v266
  %v279 = vpack.c.b16 %v273, %v270
  %v280 = vpack.c.b16 %v274, %v271
  %v281 = vpack.c.b16 %v275, %v272
  %v286 = vand.u32 %v279, %v76
  %v289 = vand.u32 %v280, %v76
  %v292 = vand.u32 %v281, %v76
  %294 = vmatpush.bf16.msra.mxu0 0
  %295 = vmatpush.bf16.msra.mxu0 0
  %296 = vmatpush.bf16.msra.mxu0 0
  %297 = vmatpush.bf16.msra.mxu0 0
  %298 = vmatpush.bf16.msra.mxu0 0
  %299 = vmatpush.bf16.msra.mxu0 0
  %300 = vmatpush.bf16.msra.mxu0 %v286
  %301 = vmatpush.bf16.msra.mxu0 %v276
  %302 = vmatmul.bf16.gmra.mxu0 %v68
  %v303 = vpop.f32.mrf.mxu0
  %v304 = vadd.f32 0.0, %v303
  %v305 = vpop.f32.mrf.mxu0
  %v306 = vadd.f32 0.0, %v305
  %307 = vmatmul.bf16.gmra.mxu0 %v71
  %v308 = vpop.f32.mrf.mxu0
  %v309 = vadd.f32 0.0, %v308
  %v310 = vpop.f32.mrf.mxu0
  %v311 = vadd.f32 0.0, %v310
  %312 = vdwg.mxu0
  %313 = vmatpush.bf16.msra.mxu0 0
  %314 = vmatpush.bf16.msra.mxu0 0
  %315 = vmatpush.bf16.msra.mxu0 0
  %316 = vmatpush.bf16.msra.mxu0 0
  %317 = vmatpush.bf16.msra.mxu0 0
  %318 = vmatpush.bf16.msra.mxu0 0
  %319 = vmatpush.bf16.msra.mxu0 %v289
  %320 = vmatpush.bf16.msra.mxu0 %v277
  %321 = vmatmul.bf16.gmra.mxu0 %v68
  %v322 = vpop.f32.mrf.mxu0
  %v323 = vadd.f32 0.0, %v322
  %v324 = vpop.f32.mrf.mxu0
  %v325 = vadd.f32 0.0, %v324
  %326 = vmatmul.bf16.gmra.mxu0 %v71
  %v327 = vpop.f32.mrf.mxu0
  %v328 = vadd.f32 0.0, %v327
  %v329 = vpop.f32.mrf.mxu0
  %v330 = vadd.f32 0.0, %v329
  %331 = vdwg.mxu0
  %332 = vmatpush.bf16.msra.mxu0 0
  %333 = vmatpush.bf16.msra.mxu0 0
  %334 = vmatpush.bf16.msra.mxu0 0
  %335 = vmatpush.bf16.msra.mxu0 0
  %336 = vmatpush.bf16.msra.mxu0 0
  %337 = vmatpush.bf16.msra.mxu0 0
  %338 = vmatpush.bf16.msra.mxu0 %v292
  %339 = vmatpush.bf16.msra.mxu0 %v278
  %340 = vmatmul.bf16.gmra.mxu0 %v68
  %v341 = vpop.f32.mrf.mxu0
  %v342 = vadd.f32 0.0, %v341
  %v343 = vpop.f32.mrf.mxu0
  %v344 = vadd.f32 0.0, %v343
  %345 = vmatmul.bf16.gmra.mxu0 %v71
  %v346 = vpop.f32.mrf.mxu0
  %v347 = vadd.f32 0.0, %v346
  %v348 = vpop.f32.mrf.mxu0
  %v349 = vadd.f32 0.0, %v348
  %350 = vdwg.mxu0
  %s351 = scalar_lea.vmem %s2, 144
  %v352 = vld [vmem:[%s351] sm:$0xff]
  %v353 = vld [vmem:[%s351 + $0x8] sm:$0xf]
  %v354 = vld [vmem:[%s351 + $0xc] sm:$0xff]
  %v355 = vld [vmem:[%s351 + $0x14] sm:$0xf]
  %v356 = vld [vmem:[%s351 + $0x18] sm:$0xff]
  %v357 = vld [vmem:[%s351 + $0x20] sm:$0xf]
  %v358 = vld [vmem:[%s351 + $0x24] sm:$0x11]
  %v359 = vld [vmem:[%s351 + $0x2c] sm:$0x1]
  %v368 = vunpack.c.l.b16 %v352
  %v369 = vunpack.c.h.b16 %v352
  %v370 = vunpack.c.l.b16 %v353
  %v371 = vunpack.c.l.b16 %v354
  %v372 = vunpack.c.h.b16 %v354
  %v373 = vunpack.c.l.b16 %v355
  %v374 = vunpack.c.l.b16 %v356
  %v375 = vunpack.c.h.b16 %v356
  %v376 = vunpack.c.l.b16 %v357
  %v377 = vunpack.c.l.b16 %v358
  %v378 = vunpack.c.h.b16 %v358
  %v379 = vunpack.c.l.b16 %v359
  %v380 = vpack.c.b16 %v371, %v368
  %v381 = vpack.c.b16 %v372, %v369
  %v382 = vpack.c.b16 %v373, %v370
  %v383 = vpack.c.b16 %v377, %v374
  %v384 = vpack.c.b16 %v378, %v375
  %v385 = vpack.c.b16 %v379, %v376
  %v390 = vand.u32 %v383, %v76
  %v393 = vand.u32 %v384, %v76
  %v396 = vand.u32 %v385, %v76
  %398 = vmatpush.bf16.msra.mxu0 0
  %399 = vmatpush.bf16.msra.mxu0 0
  %400 = vmatpush.bf16.msra.mxu0 0
  %401 = vmatpush.bf16.msra.mxu0 0
  %402 = vmatpush.bf16.msra.mxu0 0
  %403 = vmatpush.bf16.msra.mxu0 0
  %404 = vmatpush.bf16.msra.mxu0 %v390
  %405 = vmatpush.bf16.msra.mxu0 %v380
  %406 = vmatmul.bf16.gmra.mxu0 %v68
  %v407 = vpop.f32.mrf.mxu0
  %v408 = vadd.f32 0.0, %v407
  %v409 = vpop.f32.mrf.mxu0
  %v410 = vadd.f32 0.0, %v409
  %411 = vmatmul.bf16.gmra.mxu0 %v71
  %v412 = vpop.f32.mrf.mxu0
  %v413 = vadd.f32 0.0, %v412
  %v414 = vpop.f32.mrf.mxu0
  %v415 = vadd.f32 0.0, %v414
  %416 = vdwg.mxu0
  %417 = vmatpush.bf16.msra.mxu0 0
  %418 = vmatpush.bf16.msra.mxu0 0
  %419 = vmatpush.bf16.msra.mxu0 0
  %420 = vmatpush.bf16.msra.mxu0 0
  %421 = vmatpush.bf16.msra.mxu0 0
  %422 = vmatpush.bf16.msra.mxu0 0
  %423 = vmatpush.bf16.msra.mxu0 %v393
  %424 = vmatpush.bf16.msra.mxu0 %v381
  %425 = vmatmul.bf16.gmra.mxu0 %v68
  %v426 = vpop.f32.mrf.mxu0
  %v427 = vadd.f32 0.0, %v426
  %v428 = vpop.f32.mrf.mxu0
  %v429 = vadd.f32 0.0, %v428
  %430 = vmatmul.bf16.gmra.mxu0 %v71
  %v431 = vpop.f32.mrf.mxu0
  %v432 = vadd.f32 0.0, %v431
  %v433 = vpop.f32.mrf.mxu0
  %v434 = vadd.f32 0.0, %v433
  %435 = vdwg.mxu0
  %436 = vmatpush.bf16.msra.mxu0 0
  %437 = vmatpush.bf16.msra.mxu0 0
  %438 = vmatpush.bf16.msra.mxu0 0
  %439 = vmatpush.bf16.msra.mxu0 0
  %440 = vmatpush.bf16.msra.mxu0 0
  %441 = vmatpush.bf16.msra.mxu0 0
  %442 = vmatpush.bf16.msra.mxu0 %v396
  %443 = vmatpush.bf16.msra.mxu0 %v382
  %444 = vmatmul.bf16.gmra.mxu0 %v68
  %v445 = vpop.f32.mrf.mxu0
  %v446 = vadd.f32 0.0, %v445
  %v447 = vpop.f32.mrf.mxu0
  %v448 = vadd.f32 0.0, %v447
  %449 = vmatmul.bf16.gmra.mxu0 %v71
  %v450 = vpop.f32.mrf.mxu0
  %v451 = vadd.f32 0.0, %v450
  %v452 = vpop.f32.mrf.mxu0
  %v453 = vadd.f32 0.0, %v452
  %454 = vdwg.mxu0
  %v455 = vmax.f32 %v96, %v200
  %v456 = vmax.f32 %v115, %v219
  %v457 = vmax.f32 %v134, %v238
  %v458 = vmax.f32 %v98, %v202
  %v459 = vmax.f32 %v117, %v221
  %v460 = vmax.f32 %v136, %v240
  %v461 = vmax.f32 %v101, %v205
  %v462 = vmax.f32 %v120, %v224
  %v463 = vmax.f32 %v139, %v243
  %v464 = vmax.f32 %v103, %v207
  %v465 = vmax.f32 %v122, %v226
  %v466 = vmax.f32 %v141, %v245
  %v467 = vmax.f32 %v304, %v408
  %v468 = vmax.f32 %v323, %v427
  %v469 = vmax.f32 %v342, %v446
  %v470 = vmax.f32 %v306, %v410
  %v471 = vmax.f32 %v325, %v429
  %v472 = vmax.f32 %v344, %v448
  %v473 = vmax.f32 %v309, %v413
  %v474 = vmax.f32 %v328, %v432
  %v475 = vmax.f32 %v347, %v451
  %v476 = vmax.f32 %v311, %v415
  %v477 = vmax.f32 %v330, %v434
  %v478 = vmax.f32 %v349, %v453
  %v479 = vmax.f32 %v455, %v467
  %v480 = vmax.f32 %v456, %v468
  %v481 = vmax.f32 %v457, %v469
  %v482 = vmax.f32 %v458, %v470
  %v483 = vmax.f32 %v459, %v471
  %v484 = vmax.f32 %v460, %v472
  %v485 = vmax.f32 %v461, %v473
  %v486 = vmax.f32 %v462, %v474
  %v487 = vmax.f32 %v463, %v475
  %v488 = vmax.f32 %v464, %v476
  %v489 = vmax.f32 %v465, %v477
  %v490 = vmax.f32 %v466, %v478
  %v491 = vld [vmem:[%s1] sm:$0xff]
  %v492 = vld [vmem:[%s1 + $0x8] sm:$0xff]
  %v493 = vld [vmem:[%s1 + $0x10] sm:$0xff]
  %v494 = vld [vmem:[%s1 + $0x18] sm:$0xff]
  %496 = vset.pattern.permute.xlu0 0
  %497 = vperm.xlu0 %496, %v491
  %v498 = vpop.permute.xlu0 %497
  %501 = vset.pattern.permute.xlu0 0
  %502 = vperm.xlu0 %501, %v492
  %v503 = vpop.permute.xlu0 %502
  %506 = vset.pattern.permute.xlu0 0
  %507 = vperm.xlu0 %506, %v493
  %v508 = vpop.permute.xlu0 %507
  %511 = vset.pattern.permute.xlu0 0
  %512 = vperm.xlu0 %511, %v494
  %v513 = vpop.permute.xlu0 %512
  %v515 = vadd.f32 %v479, %v498
  %v516 = vadd.f32 %v480, %v498
  %v517 = vadd.f32 %v481, %v498
  %v518 = vadd.f32 %v482, %v503
  %v519 = vadd.f32 %v483, %v503
  %v520 = vadd.f32 %v484, %v503
  %v521 = vadd.f32 %v485, %v508
  %v522 = vadd.f32 %v486, %v508
  %v523 = vadd.f32 %v487, %v508
  %v524 = vadd.f32 %v488, %v513
  %v525 = vadd.f32 %v489, %v513
  %v526 = vadd.f32 %v490, %v513
  %v527 = vmax.f32 %v515, 0.0
  %v528 = vmax.f32 %v516, 0.0
  %v529 = vmax.f32 %v517, 0.0
  %v530 = vmax.f32 %v518, 0.0
  %v531 = vmax.f32 %v519, 0.0
  %v532 = vmax.f32 %v520, 0.0
  %v533 = vmax.f32 %v521, 0.0
  %v534 = vmax.f32 %v522, 0.0
  %v535 = vmax.f32 %v523, 0.0
  %v536 = vmax.f32 %v524, 0.0
  %v537 = vmax.f32 %v525, 0.0
  %v538 = vmax.f32 %v526, 0.0
  %v539 = vpack.c.bf16 %v528, %v527
  %v540 = vpack.c.bf16 %v529, %v529
  %v541 = vpack.c.bf16 %v531, %v530
  %v542 = vpack.c.bf16 %v532, %v532
  %v543 = vpack.c.bf16 %v534, %v533
  %v544 = vpack.c.bf16 %v535, %v535
  %v545 = vpack.c.bf16 %v537, %v536
  %v546 = vpack.c.bf16 %v538, %v538
  %547 = vst [vmem:[%s3] sm:$0xff] %v539
  %vm548 = vcmask 257024
  %549 = vst.msk [vmem:[%s3 + $0x8] sm:$0xf] %vm548, %v540
  %550 = vst [vmem:[%s3 + $0xc] sm:$0xff] %v541
  %551 = vst.msk [vmem:[%s3 + $0x14] sm:$0xf] %vm548, %v542
  %552 = vst [vmem:[%s3 + $0x18] sm:$0xff] %v543
  %553 = vst.msk [vmem:[%s3 + $0x20] sm:$0xf] %vm548, %v544
  %554 = vst [vmem:[%s3 + $0x24] sm:$0xff] %v545
  %555 = vst.msk [vmem:[%s3 + $0x2c] sm:$0xf] %vm548, %v546
  // Predicated region
  $region14: #{cnn_mnist2_forward.2} parent=0 // pred_check
    _
  $region15: #{cnn_mnist2_forward.2} parent=0 // pred_check_branch
    %557 = sbr.rel (0) target = $region17
  $region16: #{cnn_mnist2_forward.2} parent=0 // pred_region
    _
  $region17: #{cnn_mnist2_forward.2} parent=0 // pred_fallthru
    _
  // Predicated region
  $region18: #{cnn_mnist2_forward.2} parent=0 // pred_check
    _
  $region19: #{cnn_mnist2_forward.2} parent=0 // pred_check_branch
    %559 = sbr.rel (0) target = $region21
  $region20: #{cnn_mnist2_forward.2} parent=0 // pred_region
    _
  $region21: #{cnn_mnist2_forward.2} parent=0 // pred_fallthru
    _

// kernel: cnn_mnist2_forward.3
$region0: #{cnn_mnist2_forward.3}
  #allocation0 [shape = 'u32[]', space=smem, size = 0x4, offset = 0x4, fixed_abs, tag = 'smem constant byte address 0x4 - core index']
  #allocation1 [shape = 'u32[72,128]{1,0:T(1,128)}', space=vmem, size = 0x9000, scoped, tag = 'internal scratch']
  %s0 = inlined_call_operand.vmem [shape: bf16[64,800], index: 0, kind: input, shape index: {}]
  %s1 = inlined_call_operand.vmem [shape: f32[64,1], index: 1, kind: input, shape index: {}]
  %s2 = inlined_call_operand.vmem [shape: bf16[4,800,32], index: 2, kind: input, shape index: {}]
  %s3 = inlined_call_operand.vmem [shape: bf16[64,32], index: 3, kind: output, shape index: {}]
  %s4 = sld [smem:[#allocation0]]
  $region22: #{cnn_mnist2_forward.3} parent=0
    _
  %s6 = ssub.s32 1, %s4
  %s7 = scalar_select 0, %s6, %s4
  // Predicated region
  $region2: #{cnn_mnist2_forward.3} parent=0 // pred_check
    _
  $region3: #{cnn_mnist2_forward.3} parent=0 // pred_check_branch
    %9 = sbr.rel (0) target = $region5
  $region4: #{cnn_mnist2_forward.3} parent=0 // pred_region
    _
  $region5: #{cnn_mnist2_forward.3} parent=0 // pred_fallthru
    _
  // Predicated region
  $region6: #{cnn_mnist2_forward.3} parent=0 // pred_check
    _
  $region7: #{cnn_mnist2_forward.3} parent=0 // pred_check_branch
    %11 = sbr.rel (0) target = $region9
  $region8: #{cnn_mnist2_forward.3} parent=0 // pred_region
    _
  $region9: #{cnn_mnist2_forward.3} parent=0 // pred_fallthru
    _
  // Predicated region
  $region10: #{cnn_mnist2_forward.3} parent=0 // pred_check
    _
  $region11: #{cnn_mnist2_forward.3} parent=0 // pred_check_branch
    %13 = sbr.rel (0) target = $region13
  $region12: #{cnn_mnist2_forward.3} parent=0 // pred_region
    _
  $region13: #{cnn_mnist2_forward.3} parent=0 // pred_fallthru
    _
  %v15 = vld [vmem:[%s0] sm:$0xff]
  %v16 = vld [vmem:[%s0 + $0x8] sm:$0xff]
  %v17 = vld [vmem:[%s0 + $0x10] sm:$0xff]
  %v18 = vld [vmem:[%s0 + $0x18] sm:$0xf]
  %v19 = vld [vmem:[%s0 + $0x1c] sm:$0xff]
  %v20 = vld [vmem:[%s0 + $0x24] sm:$0xff]
  %v21 = vld [vmem:[%s0 + $0x2c] sm:$0xff]
  %v22 = vld [vmem:[%s0 + $0x34] sm:$0xf]
  %v23 = vld [vmem:[%s0 + $0x38] sm:$0xff]
  %v24 = vld [vmem:[%s0 + $0x40] sm:$0xff]
  %v25 = vld [vmem:[%s0 + $0x48] sm:$0xff]
  %v26 = vld [vmem:[%s0 + $0x50] sm:$0xf]
  %v27 = vld [vmem:[%s0 + $0x54] sm:$0xff]
  %v28 = vld [vmem:[%s0 + $0x5c] sm:$0xff]
  %v29 = vld [vmem:[%s0 + $0x64] sm:$0xff]
  %v30 = vld [vmem:[%s0 + $0x6c] sm:$0xf]
  %v31 = vld [vmem:[%s0 + $0x70] sm:$0xff]
  %v32 = vld [vmem:[%s0 + $0x78] sm:$0xff]
  %v33 = vld [vmem:[%s0 + $0x80] sm:$0xff]
  %v34 = vld [vmem:[%s0 + $0x88] sm:$0xf]
  %v35 = vld [vmem:[%s0 + $0x8c] sm:$0xff]
  %v36 = vld [vmem:[%s0 + $0x94] sm:$0xff]
  %v37 = vld [vmem:[%s0 + $0x9c] sm:$0xff]
  %v38 = vld [vmem:[%s0 + $0xa4] sm:$0xf]
  %v39 = vld [vmem:[%s0 + $0xa8] sm:$0xff]
  %v40 = vld [vmem:[%s0 + $0xb0] sm:$0xff]
  %v41 = vld [vmem:[%s0 + $0xb8] sm:$0xff]
  %v42 = vld [vmem:[%s0 + $0xc0] sm:$0xf]
  %v43 = vld [vmem:[%s0 + $0xc4] sm:$0xff]
  %v44 = vld [vmem:[%s0 + $0xcc] sm:$0xff]
  %v45 = vld [vmem:[%s0 + $0xd4] sm:$0xff]
  %v46 = vld [vmem:[%s0 + $0xdc] sm:$0xf]
  %v47 = vld [vmem:[%s2] sm:$0xf]
  %v48 = vld [vmem:[%s2 + $0x4] sm:$0xf]
  %v49 = vld [vmem:[%s2 + $0x8] sm:$0xf]
  %v50 = vld [vmem:[%s2 + $0xc] sm:$0xf]
  %v51 = vld [vmem:[%s2 + $0x10] sm:$0xf]
  %v52 = vld [vmem:[%s2 + $0x14] sm:$0xf]
  %v53 = vld [vmem:[%s2 + $0x18] sm:$0xf]
  %v54 = vld [vmem:[%s2 + $0x1c] sm:$0xf]
  %v55 = vld [vmem:[%s2 + $0x20] sm:$0xf]
  %v56 = vld [vmem:[%s2 + $0x24] sm:$0xf]
  %v57 = vld [vmem:[%s2 + $0x28] sm:$0xf]
  %v58 = vld [vmem:[%s2 + $0x2c] sm:$0xf]
  %v59 = vld [vmem:[%s2 + $0x30] sm:$0xf]
  %v60 = vld [vmem:[%s2 + $0x34] sm:$0xf]
  %v61 = vld [vmem:[%s2 + $0x38] sm:$0xf]
  %v62 = vld [vmem:[%s2 + $0x3c] sm:$0xf]
  %v63 = vld [vmem:[%s2 + $0x40] sm:$0xf]
  %v64 = vld [vmem:[%s2 + $0x44] sm:$0xf]
  %v65 = vld [vmem:[%s2 + $0x48] sm:$0xf]
  %v66 = vld [vmem:[%s2 + $0x4c] sm:$0xf]
  %v67 = vld [vmem:[%s2 + $0x50] sm:$0xf]
  %v68 = vld [vmem:[%s2 + $0x54] sm:$0xf]
  %v69 = vld [vmem:[%s2 + $0x58] sm:$0xf]
  %v70 = vld [vmem:[%s2 + $0x5c] sm:$0xf]
  %v71 = vld [vmem:[%s2 + $0x60] sm:$0xf]
  %v72 = vld [vmem:[%s2 + $0x64] sm:$0xf]
  %v73 = vld [vmem:[%s2 + $0x68] sm:$0xf]
  %v74 = vld [vmem:[%s2 + $0x6c] sm:$0xf]
  %v75 = vld [vmem:[%s2 + $0x70] sm:$0xf]
  %v76 = vld [vmem:[%s2 + $0x74] sm:$0xf]
  %v77 = vld [vmem:[%s2 + $0x78] sm:$0xf]
  %v78 = vld [vmem:[%s2 + $0x7c] sm:$0xf]
  %v79 = vld [vmem:[%s2 + $0x80] sm:$0xf]
  %v80 = vld [vmem:[%s2 + $0x84] sm:$0xf]
  %v81 = vld [vmem:[%s2 + $0x88] sm:$0xf]
  %v82 = vld [vmem:[%s2 + $0x8c] sm:$0xf]
  %v83 = vld [vmem:[%s2 + $0x90] sm:$0xf]
  %v84 = vld [vmem:[%s2 + $0x94] sm:$0xf]
  %v85 = vld [vmem:[%s2 + $0x98] sm:$0xf]
  %v86 = vld [vmem:[%s2 + $0x9c] sm:$0xf]
  %v87 = vld [vmem:[%s2 + $0xa0] sm:$0xf]
  %v88 = vld [vmem:[%s2 + $0xa4] sm:$0xf]
  %v89 = vld [vmem:[%s2 + $0xa8] sm:$0xf]
  %v90 = vld [vmem:[%s2 + $0xac] sm:$0xf]
  %v91 = vld [vmem:[%s2 + $0xb0] sm:$0xf]
  %v92 = vld [vmem:[%s2 + $0xb4] sm:$0xf]
  %v93 = vld [vmem:[%s2 + $0xb8] sm:$0xf]
  %v94 = vld [vmem:[%s2 + $0xbc] sm:$0xf]
  %v95 = vld [vmem:[%s2 + $0xc0] sm:$0xf]
  %v96 = vld [vmem:[%s2 + $0xc4] sm:$0xf]
  %v97 = vld [vmem:[%s2 + $0xc8] sm:$0xf]
  %v98 = vld [vmem:[%s2 + $0xcc] sm:$0xf]
  %v99 = vld [vmem:[%s2 + $0xd0] sm:$0xf]
  %v100 = vld [vmem:[%s2 + $0xd4] sm:$0xf]
  %v101 = vld [vmem:[%s2 + $0xd8] sm:$0xf]
  %v102 = vld [vmem:[%s2 + $0xdc] sm:$0xf]
  %v103 = vld [vmem:[%s2 + $0xe0] sm:$0xf]
  %v104 = vld [vmem:[%s2 + $0xe4] sm:$0xf]
  %v105 = vld [vmem:[%s2 + $0xe8] sm:$0xf]
  %v106 = vld [vmem:[%s2 + $0xec] sm:$0xf]
  %v107 = vld [vmem:[%s2 + $0xf0] sm:$0xf]
  %v108 = vld [vmem:[%s2 + $0xf4] sm:$0xf]
  %v109 = vld [vmem:[%s2 + $0xf8] sm:$0xf]
  %v110 = vld [vmem:[%s2 + $0xfc] sm:$0xf]
  %v111 = vld [vmem:[%s2 + $0x100] sm:$0xf]
  %v112 = vld [vmem:[%s2 + $0x104] sm:$0xf]
  %v113 = vld [vmem:[%s2 + $0x108] sm:$0xf]
  %v114 = vld [vmem:[%s2 + $0x10c] sm:$0xf]
  %v115 = vld [vmem:[%s2 + $0x110] sm:$0xf]
  %v116 = vld [vmem:[%s2 + $0x114] sm:$0xf]
  %v117 = vld [vmem:[%s2 + $0x118] sm:$0xf]
  %v118 = vld [vmem:[%s2 + $0x11c] sm:$0xf]
  %v119 = vld [vmem:[%s2 + $0x120] sm:$0xf]
  %v120 = vld [vmem:[%s2 + $0x124] sm:$0xf]
  %v121 = vld [vmem:[%s2 + $0x128] sm:$0xf]
  %v122 = vld [vmem:[%s2 + $0x12c] sm:$0xf]
  %v123 = vld [vmem:[%s2 + $0x130] sm:$0xf]
  %v124 = vld [vmem:[%s2 + $0x134] sm:$0xf]
  %v125 = vld [vmem:[%s2 + $0x138] sm:$0xf]
  %v126 = vld [vmem:[%s2 + $0x13c] sm:$0xf]
  %v127 = vld [vmem:[%s2 + $0x140] sm:$0xf]
  %v128 = vld [vmem:[%s2 + $0x144] sm:$0xf]
  %v129 = vld [vmem:[%s2 + $0x148] sm:$0xf]
  %v130 = vld [vmem:[%s2 + $0x14c] sm:$0xf]
  %v131 = vld [vmem:[%s2 + $0x150] sm:$0xf]
  %v132 = vld [vmem:[%s2 + $0x154] sm:$0xf]
  %v133 = vld [vmem:[%s2 + $0x158] sm:$0xf]
  %v134 = vld [vmem:[%s2 + $0x15c] sm:$0xf]
  %v135 = vld [vmem:[%s2 + $0x160] sm:$0xf]
  %v136 = vld [vmem:[%s2 + $0x164] sm:$0xf]
  %v137 = vld [vmem:[%s2 + $0x168] sm:$0xf]
  %v138 = vld [vmem:[%s2 + $0x16c] sm:$0xf]
  %v139 = vld [vmem:[%s2 + $0x170] sm:$0xf]
  %v140 = vld [vmem:[%s2 + $0x174] sm:$0xf]
  %v141 = vld [vmem:[%s2 + $0x178] sm:$0xf]
  %v142 = vld [vmem:[%s2 + $0x17c] sm:$0xf]
  %v143 = vld [vmem:[%s2 + $0x180] sm:$0xf]
  %v144 = vld [vmem:[%s2 + $0x184] sm:$0xf]
  %v145 = vld [vmem:[%s2 + $0x188] sm:$0xf]
  %v146 = vld [vmem:[%s2 + $0x18c] sm:$0xf]
  %v179 = vunpack.c.l.b16 %v15
  %v180 = vunpack.c.h.b16 %v15
  %v181 = vunpack.c.l.b16 %v16
  %v182 = vunpack.c.h.b16 %v16
  %v183 = vunpack.c.l.b16 %v17
  %v184 = vunpack.c.h.b16 %v17
  %v185 = vunpack.c.l.b16 %v18
  %v186 = vunpack.c.l.b16 %v19
  %v187 = vunpack.c.h.b16 %v19
  %v188 = vunpack.c.l.b16 %v20
  %v189 = vunpack.c.h.b16 %v20
  %v190 = vunpack.c.l.b16 %v21
  %v191 = vunpack.c.h.b16 %v21
  %v192 = vunpack.c.l.b16 %v22
  %v193 = vunpack.c.l.b16 %v23
  %v194 = vunpack.c.h.b16 %v23
  %v195 = vunpack.c.l.b16 %v24
  %v196 = vunpack.c.h.b16 %v24
  %v197 = vunpack.c.l.b16 %v25
  %v198 = vunpack.c.h.b16 %v25
  %v199 = vunpack.c.l.b16 %v26
  %v200 = vunpack.c.l.b16 %v27
  %v201 = vunpack.c.h.b16 %v27
  %v202 = vunpack.c.l.b16 %v28
  %v203 = vunpack.c.h.b16 %v28
  %v204 = vunpack.c.l.b16 %v29
  %v205 = vunpack.c.h.b16 %v29
  %v206 = vunpack.c.l.b16 %v30
  %v207 = vunpack.c.l.b16 %v31
  %v208 = vunpack.c.h.b16 %v31
  %v209 = vunpack.c.l.b16 %v32
  %v210 = vunpack.c.h.b16 %v32
  %v211 = vunpack.c.l.b16 %v33
  %v212 = vunpack.c.h.b16 %v33
  %v213 = vunpack.c.l.b16 %v34
  %v214 = vunpack.c.l.b16 %v35
  %v215 = vunpack.c.h.b16 %v35
  %v216 = vunpack.c.l.b16 %v36
  %v217 = vunpack.c.h.b16 %v36
  %v218 = vunpack.c.l.b16 %v37
  %v219 = vunpack.c.h.b16 %v37
  %v220 = vunpack.c.l.b16 %v38
  %v221 = vunpack.c.l.b16 %v39
  %v222 = vunpack.c.h.b16 %v39
  %v223 = vunpack.c.l.b16 %v40
  %v224 = vunpack.c.h.b16 %v40
  %v225 = vunpack.c.l.b16 %v41
  %v226 = vunpack.c.h.b16 %v41
  %v227 = vunpack.c.l.b16 %v42
  %v228 = vunpack.c.l.b16 %v43
  %v229 = vunpack.c.h.b16 %v43
  %v230 = vunpack.c.l.b16 %v44
  %v231 = vunpack.c.h.b16 %v44
  %v232 = vunpack.c.l.b16 %v45
  %v233 = vunpack.c.h.b16 %v45
  %v234 = vunpack.c.l.b16 %v46
  %v235 = vpack.c.b16 %v186, %v179
  %v236 = vpack.c.b16 %v187, %v180
  %v237 = vpack.c.b16 %v188, %v181
  %v238 = vpack.c.b16 %v189, %v182
  %v239 = vpack.c.b16 %v190, %v183
  %v240 = vpack.c.b16 %v191, %v184
  %v241 = vpack.c.b16 %v192, %v185
  %v242 = vpack.c.b16 %v200, %v193
  %v243 = vpack.c.b16 %v201, %v194
  %v244 = vpack.c.b16 %v202, %v195
  %v245 = vpack.c.b16 %v203, %v196
  %v246 = vpack.c.b16 %v204, %v197
  %v247 = vpack.c.b16 %v205, %v198
  %v248 = vpack.c.b16 %v206, %v199
  %v249 = vpack.c.b16 %v214, %v207
  %v250 = vpack.c.b16 %v215, %v208
  %v251 = vpack.c.b16 %v216, %v209
  %v252 = vpack.c.b16 %v217, %v210
  %v253 = vpack.c.b16 %v218, %v211
  %v254 = vpack.c.b16 %v219, %v212
  %v255 = vpack.c.b16 %v220, %v213
  %v256 = vpack.c.b16 %v228, %v221
  %v257 = vpack.c.b16 %v229, %v222
  %v258 = vpack.c.b16 %v230, %v223
  %v259 = vpack.c.b16 %v231, %v224
  %v260 = vpack.c.b16 %v232, %v225
  %v261 = vpack.c.b16 %v233, %v226
  %v262 = vpack.c.b16 %v234, %v227
  %v387 = vunpack.c.l.b16 %v47
  %v388 = vunpack.c.l.b16 %v48
  %v389 = vunpack.c.l.b16 %v49
  %v390 = vunpack.c.l.b16 %v50
  %v391 = vunpack.c.l.b16 %v51
  %v392 = vunpack.c.l.b16 %v52
  %v393 = vunpack.c.l.b16 %v53
  %v394 = vunpack.c.l.b16 %v54
  %v395 = vunpack.c.l.b16 %v55
  %v396 = vunpack.c.l.b16 %v56
  %v397 = vunpack.c.l.b16 %v57
  %v398 = vunpack.c.l.b16 %v58
  %v399 = vunpack.c.l.b16 %v59
  %v400 = vunpack.c.l.b16 %v60
  %v401 = vunpack.c.l.b16 %v61
  %v402 = vunpack.c.l.b16 %v62
  %v403 = vunpack.c.l.b16 %v63
  %v404 = vunpack.c.l.b16 %v64
  %v405 = vunpack.c.l.b16 %v65
  %v406 = vunpack.c.l.b16 %v66
  %v407 = vunpack.c.l.b16 %v67
  %v408 = vunpack.c.l.b16 %v68
  %v409 = vunpack.c.l.b16 %v69
  %v410 = vunpack.c.l.b16 %v70
  %v411 = vunpack.c.l.b16 %v71
  %v412 = vunpack.c.l.b16 %v72
  %v413 = vunpack.c.l.b16 %v73
  %v414 = vunpack.c.l.b16 %v74
  %v415 = vunpack.c.l.b16 %v75
  %v416 = vunpack.c.l.b16 %v76
  %v417 = vunpack.c.l.b16 %v77
  %v418 = vunpack.c.l.b16 %v78
  %v419 = vunpack.c.l.b16 %v79
  %v420 = vunpack.c.l.b16 %v80
  %v421 = vunpack.c.l.b16 %v81
  %v422 = vunpack.c.l.b16 %v82
  %v423 = vunpack.c.l.b16 %v83
  %v424 = vunpack.c.l.b16 %v84
  %v425 = vunpack.c.l.b16 %v85
  %v426 = vunpack.c.l.b16 %v86
  %v427 = vunpack.c.l.b16 %v87
  %v428 = vunpack.c.l.b16 %v88
  %v429 = vunpack.c.l.b16 %v89
  %v430 = vunpack.c.l.b16 %v90
  %v431 = vunpack.c.l.b16 %v91
  %v432 = vunpack.c.l.b16 %v92
  %v433 = vunpack.c.l.b16 %v93
  %v434 = vunpack.c.l.b16 %v94
  %v435 = vunpack.c.l.b16 %v95
  %v436 = vunpack.c.l.b16 %v96
  %v437 = vunpack.c.l.b16 %v97
  %v438 = vunpack.c.l.b16 %v98
  %v439 = vunpack.c.l.b16 %v99
  %v440 = vunpack.c.l.b16 %v100
  %v441 = vunpack.c.l.b16 %v101
  %v442 = vunpack.c.l.b16 %v102
  %v443 = vunpack.c.l.b16 %v103
  %v444 = vunpack.c.l.b16 %v104
  %v445 = vunpack.c.l.b16 %v105
  %v446 = vunpack.c.l.b16 %v106
  %v447 = vunpack.c.l.b16 %v107
  %v448 = vunpack.c.l.b16 %v108
  %v449 = vunpack.c.l.b16 %v109
  %v450 = vunpack.c.l.b16 %v110
  %v451 = vunpack.c.l.b16 %v111
  %v452 = vunpack.c.l.b16 %v112
  %v453 = vunpack.c.l.b16 %v113
  %v454 = vunpack.c.l.b16 %v114
  %v455 = vunpack.c.l.b16 %v115
  %v456 = vunpack.c.l.b16 %v116
  %v457 = vunpack.c.l.b16 %v117
  %v458 = vunpack.c.l.b16 %v118
  %v459 = vunpack.c.l.b16 %v119
  %v460 = vunpack.c.l.b16 %v120
  %v461 = vunpack.c.l.b16 %v121
  %v462 = vunpack.c.l.b16 %v122
  %v463 = vunpack.c.l.b16 %v123
  %v464 = vunpack.c.l.b16 %v124
  %v465 = vunpack.c.l.b16 %v125
  %v466 = vunpack.c.l.b16 %v126
  %v467 = vunpack.c.l.b16 %v127
  %v468 = vunpack.c.l.b16 %v128
  %v469 = vunpack.c.l.b16 %v129
  %v470 = vunpack.c.l.b16 %v130
  %v471 = vunpack.c.l.b16 %v131
  %v472 = vunpack.c.l.b16 %v132
  %v473 = vunpack.c.l.b16 %v133
  %v474 = vunpack.c.l.b16 %v134
  %v475 = vunpack.c.l.b16 %v135
  %v476 = vunpack.c.l.b16 %v136
  %v477 = vunpack.c.l.b16 %v137
  %v478 = vunpack.c.l.b16 %v138
  %v479 = vunpack.c.l.b16 %v139
  %v480 = vunpack.c.l.b16 %v140
  %v481 = vunpack.c.l.b16 %v141
  %v482 = vunpack.c.l.b16 %v142
  %v483 = vunpack.c.l.b16 %v143
  %v484 = vunpack.c.l.b16 %v144
  %v485 = vunpack.c.l.b16 %v145
  %v486 = vunpack.c.l.b16 %v146
  %v487 = vpack.c.b16 %v388, %v387
  %v488 = vpack.c.b16 %v390, %v389
  %v489 = vpack.c.b16 %v392, %v391
  %v490 = vpack.c.b16 %v394, %v393
  %v491 = vpack.c.b16 %v396, %v395
  %v492 = vpack.c.b16 %v398, %v397
  %v493 = vpack.c.b16 %v400, %v399
  %v494 = vpack.c.b16 %v402, %v401
  %v495 = vpack.c.b16 %v404, %v403
  %v496 = vpack.c.b16 %v406, %v405
  %v497 = vpack.c.b16 %v408, %v407
  %v498 = vpack.c.b16 %v410, %v409
  %v499 = vpack.c.b16 %v412, %v411
  %v500 = vpack.c.b16 %v414, %v413
  %v501 = vpack.c.b16 %v416, %v415
  %v502 = vpack.c.b16 %v418, %v417
  %v503 = vpack.c.b16 %v420, %v419
  %v504 = vpack.c.b16 %v422, %v421
  %v505 = vpack.c.b16 %v424, %v423
  %v506 = vpack.c.b16 %v426, %v425
  %v507 = vpack.c.b16 %v428, %v427
  %v508 = vpack.c.b16 %v430, %v429
  %v509 = vpack.c.b16 %v432, %v431
  %v510 = vpack.c.b16 %v434, %v433
  %v511 = vpack.c.b16 %v436, %v435
  %v512 = vpack.c.b16 %v438, %v437
  %v513 = vpack.c.b16 %v440, %v439
  %v514 = vpack.c.b16 %v442, %v441
  %v515 = vpack.c.b16 %v444, %v443
  %v516 = vpack.c.b16 %v446, %v445
  %v517 = vpack.c.b16 %v448, %v447
  %v518 = vpack.c.b16 %v450, %v449
  %v519 = vpack.c.b16 %v452, %v451
  %v520 = vpack.c.b16 %v454, %v453
  %v521 = vpack.c.b16 %v456, %v455
  %v522 = vpack.c.b16 %v458, %v457
  %v523 = vpack.c.b16 %v460, %v459
  %v524 = vpack.c.b16 %v462, %v461
  %v525 = vpack.c.b16 %v464, %v463
  %v526 = vpack.c.b16 %v466, %v465
  %v527 = vpack.c.b16 %v468, %v467
  %v528 = vpack.c.b16 %v470, %v469
  %v529 = vpack.c.b16 %v472, %v471
  %v530 = vpack.c.b16 %v474, %v473
  %v531 = vpack.c.b16 %v476, %v475
  %v532 = vpack.c.b16 %v478, %v477
  %v533 = vpack.c.b16 %v480, %v479
  %v534 = vpack.c.b16 %v482, %v481
  %v535 = vpack.c.b16 %v484, %v483
  %v536 = vpack.c.b16 %v486, %v485
  %vm587 = vcmask 261120
  %v589 = vsel %vm587, %v241, 0
  %v592 = vsel %vm587, %v248, 0
  %v595 = vsel %vm587, %v255, 0
  %v598 = vsel %vm587, %v262, 0
  %600 = vmatpush.bf16.msra.mxu0 %v494
  %601 = vmatpush.bf16.msra.mxu0 %v493
  %602 = vmatpush.bf16.msra.mxu0 %v492
  %603 = vmatpush.bf16.msra.mxu0 %v491
  %604 = vmatpush.bf16.msra.mxu0 %v490
  %605 = vmatpush.bf16.msra.mxu0 %v489
  %606 = vmatpush.bf16.msra.mxu0 %v488
  %607 = vmatpush.bf16.msra.mxu0 %v487
  %608 = vmatmul.bf16.gmra.mxu0 %v235
  %v609 = vpop.f32.mrf.mxu0
  %v610 = vadd.f32 0.0, %v609
  %v611 = vpop.f32.mrf.mxu0
  %v612 = vadd.f32 0.0, %v611
  %613 = vmatmul.bf16.gmra.mxu0 %v242
  %v614 = vpop.f32.mrf.mxu0
  %v615 = vadd.f32 0.0, %v614
  %v616 = vpop.f32.mrf.mxu0
  %v617 = vadd.f32 0.0, %v616
  %618 = vmatmul.bf16.gmra.mxu0 %v249
  %v619 = vpop.f32.mrf.mxu0
  %v620 = vadd.f32 0.0, %v619
  %v621 = vpop.f32.mrf.mxu0
  %v622 = vadd.f32 0.0, %v621
  %623 = vmatmul.bf16.gmra.mxu0 %v256
  %v624 = vpop.f32.mrf.mxu0
  %v625 = vadd.f32 0.0, %v624
  %v626 = vpop.f32.mrf.mxu0
  %v627 = vadd.f32 0.0, %v626
  %628 = vdwg.mxu0
  %629 = vmatpush.bf16.msra.mxu0 %v502
  %630 = vmatpush.bf16.msra.mxu0 %v501
  %631 = vmatpush.bf16.msra.mxu0 %v500
  %632 = vmatpush.bf16.msra.mxu0 %v499
  %633 = vmatpush.bf16.msra.mxu0 %v498
  %634 = vmatpush.bf16.msra.mxu0 %v497
  %635 = vmatpush.bf16.msra.mxu0 %v496
  %636 = vmatpush.bf16.msra.mxu0 %v495
  %637 = vmatmul.bf16.gmra.mxu0 %v236
  %v638 = vpop.f32.mrf.mxu0
  %v639 = vadd.f32 %v610, %v638
  %v640 = vpop.f32.mrf.mxu0
  %v641 = vadd.f32 %v612, %v640
  %642 = vmatmul.bf16.gmra.mxu0 %v243
  %v643 = vpop.f32.mrf.mxu0
  %v644 = vadd.f32 %v615, %v643
  %v645 = vpop.f32.mrf.mxu0
  %v646 = vadd.f32 %v617, %v645
  %647 = vmatmul.bf16.gmra.mxu0 %v250
  %v648 = vpop.f32.mrf.mxu0
  %v649 = vadd.f32 %v620, %v648
  %v650 = vpop.f32.mrf.mxu0
  %v651 = vadd.f32 %v622, %v650
  %652 = vmatmul.bf16.gmra.mxu0 %v257
  %v653 = vpop.f32.mrf.mxu0
  %v654 = vadd.f32 %v625, %v653
  %v655 = vpop.f32.mrf.mxu0
  %v656 = vadd.f32 %v627, %v655
  %657 = vdwg.mxu0
  %658 = vmatpush.bf16.msra.mxu0 %v510
  %659 = vmatpush.bf16.msra.mxu0 %v509
  %660 = vmatpush.bf16.msra.mxu0 %v508
  %661 = vmatpush.bf16.msra.mxu0 %v507
  %662 = vmatpush.bf16.msra.mxu0 %v506
  %663 = vmatpush.bf16.msra.mxu0 %v505
  %664 = vmatpush.bf16.msra.mxu0 %v504
  %665 = vmatpush.bf16.msra.mxu0 %v503
  %666 = vmatmul.bf16.gmra.mxu0 %v237
  %v667 = vpop.f32.mrf.mxu0
  %v668 = vadd.f32 %v639, %v667
  %v669 = vpop.f32.mrf.mxu0
  %v670 = vadd.f32 %v641, %v669
  %671 = vmatmul.bf16.gmra.mxu0 %v244
  %v672 = vpop.f32.mrf.mxu0
  %v673 = vadd.f32 %v644, %v672
  %v674 = vpop.f32.mrf.mxu0
  %v675 = vadd.f32 %v646, %v674
  %676 = vmatmul.bf16.gmra.mxu0 %v251
  %v677 = vpop.f32.mrf.mxu0
  %v678 = vadd.f32 %v649, %v677
  %v679 = vpop.f32.mrf.mxu0
  %v680 = vadd.f32 %v651, %v679
  %681 = vmatmul.bf16.gmra.mxu0 %v258
  %v682 = vpop.f32.mrf.mxu0
  %v683 = vadd.f32 %v654, %v682
  %v684 = vpop.f32.mrf.mxu0
  %v685 = vadd.f32 %v656, %v684
  %686 = vdwg.mxu0
  %687 = vmatpush.bf16.msra.mxu0 %v518
  %688 = vmatpush.bf16.msra.mxu0 %v517
  %689 = vmatpush.bf16.msra.mxu0 %v516
  %690 = vmatpush.bf16.msra.mxu0 %v515
  %691 = vmatpush.bf16.msra.mxu0 %v514
  %692 = vmatpush.bf16.msra.mxu0 %v513
  %693 = vmatpush.bf16.msra.mxu0 %v512
  %694 = vmatpush.bf16.msra.mxu0 %v511
  %695 = vmatmul.bf16.gmra.mxu0 %v238
  %v696 = vpop.f32.mrf.mxu0
  %v697 = vadd.f32 %v668, %v696
  %v698 = vpop.f32.mrf.mxu0
  %v699 = vadd.f32 %v670, %v698
  %700 = vmatmul.bf16.gmra.mxu0 %v245
  %v701 = vpop.f32.mrf.mxu0
  %v702 = vadd.f32 %v673, %v701
  %v703 = vpop.f32.mrf.mxu0
  %v704 = vadd.f32 %v675, %v703
  %705 = vmatmul.bf16.gmra.mxu0 %v252
  %v706 = vpop.f32.mrf.mxu0
  %v707 = vadd.f32 %v678, %v706
  %v708 = vpop.f32.mrf.mxu0
  %v709 = vadd.f32 %v680, %v708
  %710 = vmatmul.bf16.gmra.mxu0 %v259
  %v711 = vpop.f32.mrf.mxu0
  %v712 = vadd.f32 %v683, %v711
  %v713 = vpop.f32.mrf.mxu0
  %v714 = vadd.f32 %v685, %v713
  %715 = vdwg.mxu0
  %716 = vmatpush.bf16.msra.mxu0 %v526
  %717 = vmatpush.bf16.msra.mxu0 %v525
  %718 = vmatpush.bf16.msra.mxu0 %v524
  %719 = vmatpush.bf16.msra.mxu0 %v523
  %720 = vmatpush.bf16.msra.mxu0 %v522
  %721 = vmatpush.bf16.msra.mxu0 %v521
  %722 = vmatpush.bf16.msra.mxu0 %v520
  %723 = vmatpush.bf16.msra.mxu0 %v519
  %724 = vmatmul.bf16.gmra.mxu0 %v239
  %v725 = vpop.f32.mrf.mxu0
  %v726 = vadd.f32 %v697, %v725
  %v727 = vpop.f32.mrf.mxu0
  %v728 = vadd.f32 %v699, %v727
  %729 = vmatmul.bf16.gmra.mxu0 %v246
  %v730 = vpop.f32.mrf.mxu0
  %v731 = vadd.f32 %v702, %v730
  %v732 = vpop.f32.mrf.mxu0
  %v733 = vadd.f32 %v704, %v732
  %734 = vmatmul.bf16.gmra.mxu0 %v253
  %v735 = vpop.f32.mrf.mxu0
  %v736 = vadd.f32 %v707, %v735
  %v737 = vpop.f32.mrf.mxu0
  %v738 = vadd.f32 %v709, %v737
  %739 = vmatmul.bf16.gmra.mxu0 %v260
  %v740 = vpop.f32.mrf.mxu0
  %v741 = vadd.f32 %v712, %v740
  %v742 = vpop.f32.mrf.mxu0
  %v743 = vadd.f32 %v714, %v742
  %744 = vdwg.mxu0
  %745 = vmatpush.bf16.msra.mxu0 %v534
  %746 = vmatpush.bf16.msra.mxu0 %v533
  %747 = vmatpush.bf16.msra.mxu0 %v532
  %748 = vmatpush.bf16.msra.mxu0 %v531
  %749 = vmatpush.bf16.msra.mxu0 %v530
  %750 = vmatpush.bf16.msra.mxu0 %v529
  %751 = vmatpush.bf16.msra.mxu0 %v528
  %752 = vmatpush.bf16.msra.mxu0 %v527
  %753 = vmatmul.bf16.gmra.mxu0 %v240
  %v754 = vpop.f32.mrf.mxu0
  %v755 = vadd.f32 %v726, %v754
  %v756 = vpop.f32.mrf.mxu0
  %v757 = vadd.f32 %v728, %v756
  %758 = vmatmul.bf16.gmra.mxu0 %v247
  %v759 = vpop.f32.mrf.mxu0
  %v760 = vadd.f32 %v731, %v759
  %v761 = vpop.f32.mrf.mxu0
  %v762 = vadd.f32 %v733, %v761
  %763 = vmatmul.bf16.gmra.mxu0 %v254
  %v764 = vpop.f32.mrf.mxu0
  %v765 = vadd.f32 %v736, %v764
  %v766 = vpop.f32.mrf.mxu0
  %v767 = vadd.f32 %v738, %v766
  %768 = vmatmul.bf16.gmra.mxu0 %v261
  %v769 = vpop.f32.mrf.mxu0
  %v770 = vadd.f32 %v741, %v769
  %v771 = vpop.f32.mrf.mxu0
  %v772 = vadd.f32 %v743, %v771
  %773 = vdwg.mxu0
  %774 = vmatpush.bf16.msra.mxu0 0
  %775 = vmatpush.bf16.msra.mxu0 0
  %776 = vmatpush.bf16.msra.mxu0 0
  %777 = vmatpush.bf16.msra.mxu0 0
  %778 = vmatpush.bf16.msra.mxu0 0
  %779 = vmatpush.bf16.msra.mxu0 0
  %780 = vmatpush.bf16.msra.mxu0 %v536
  %781 = vmatpush.bf16.msra.mxu0 %v535
  %782 = vmatmul.bf16.gmra.mxu0 %v589
  %v783 = vpop.f32.mrf.mxu0
  %v784 = vadd.f32 %v755, %v783
  %v785 = vpop.f32.mrf.mxu0
  %v786 = vadd.f32 %v757, %v785
  %787 = vmatmul.bf16.gmra.mxu0 %v592
  %v788 = vpop.f32.mrf.mxu0
  %v789 = vadd.f32 %v760, %v788
  %v790 = vpop.f32.mrf.mxu0
  %v791 = vadd.f32 %v762, %v790
  %792 = vmatmul.bf16.gmra.mxu0 %v595
  %v793 = vpop.f32.mrf.mxu0
  %v794 = vadd.f32 %v765, %v793
  %v795 = vpop.f32.mrf.mxu0
  %v796 = vadd.f32 %v767, %v795
  %797 = vmatmul.bf16.gmra.mxu0 %v598
  %v798 = vpop.f32.mrf.mxu0
  %v799 = vadd.f32 %v770, %v798
  %v800 = vpop.f32.mrf.mxu0
  %v801 = vadd.f32 %v772, %v800
  %802 = vdwg.mxu0
  %s803 = scalar_lea.vmem %s2, 400
  %v804 = vld [vmem:[%s803] sm:$0xf]
  %v805 = vld [vmem:[%s803 + $0x4] sm:$0xf]
  %v806 = vld [vmem:[%s803 + $0x8] sm:$0xf]
  %v807 = vld [vmem:[%s803 + $0xc] sm:$0xf]
  %v808 = vld [vmem:[%s803 + $0x10] sm:$0xf]
  %v809 = vld [vmem:[%s803 + $0x14] sm:$0xf]
  %v810 = vld [vmem:[%s803 + $0x18] sm:$0xf]
  %v811 = vld [vmem:[%s803 + $0x1c] sm:$0xf]
  %v812 = vld [vmem:[%s803 + $0x20] sm:$0xf]
  %v813 = vld [vmem:[%s803 + $0x24] sm:$0xf]
  %v814 = vld [vmem:[%s803 + $0x28] sm:$0xf]
  %v815 = vld [vmem:[%s803 + $0x2c] sm:$0xf]
  %v816 = vld [vmem:[%s803 + $0x30] sm:$0xf]
  %v817 = vld [vmem:[%s803 + $0x34] sm:$0xf]
  %v818 = vld [vmem:[%s803 + $0x38] sm:$0xf]
  %v819 = vld [vmem:[%s803 + $0x3c] sm:$0xf]
  %v820 = vld [vmem:[%s803 + $0x40] sm:$0xf]
  %v821 = vld [vmem:[%s803 + $0x44] sm:$0xf]
  %v822 = vld [vmem:[%s803 + $0x48] sm:$0xf]
  %v823 = vld [vmem:[%s803 + $0x4c] sm:$0xf]
  %v824 = vld [vmem:[%s803 + $0x50] sm:$0xf]
  %v825 = vld [vmem:[%s803 + $0x54] sm:$0xf]
  %v826 = vld [vmem:[%s803 + $0x58] sm:$0xf]
  %v827 = vld [vmem:[%s803 + $0x5c] sm:$0xf]
  %v828 = vld [vmem:[%s803 + $0x60] sm:$0xf]
  %v829 = vld [vmem:[%s803 + $0x64] sm:$0xf]
  %v830 = vld [vmem:[%s803 + $0x68] sm:$0xf]
  %v831 = vld [vmem:[%s803 + $0x6c] sm:$0xf]
  %v832 = vld [vmem:[%s803 + $0x70] sm:$0xf]
  %v833 = vld [vmem:[%s803 + $0x74] sm:$0xf]
  %v834 = vld [vmem:[%s803 + $0x78] sm:$0xf]
  %v835 = vld [vmem:[%s803 + $0x7c] sm:$0xf]
  %v836 = vld [vmem:[%s803 + $0x80] sm:$0xf]
  %v837 = vld [vmem:[%s803 + $0x84] sm:$0xf]
  %v838 = vld [vmem:[%s803 + $0x88] sm:$0xf]
  %v839 = vld [vmem:[%s803 + $0x8c] sm:$0xf]
  %v840 = vld [vmem:[%s803 + $0x90] sm:$0xf]
  %v841 = vld [vmem:[%s803 + $0x94] sm:$0xf]
  %v842 = vld [vmem:[%s803 + $0x98] sm:$0xf]
  %v843 = vld [vmem:[%s803 + $0x9c] sm:$0xf]
  %v844 = vld [vmem:[%s803 + $0xa0] sm:$0xf]
  %v845 = vld [vmem:[%s803 + $0xa4] sm:$0xf]
  %v846 = vld [vmem:[%s803 + $0xa8] sm:$0xf]
  %v847 = vld [vmem:[%s803 + $0xac] sm:$0xf]
  %v848 = vld [vmem:[%s803 + $0xb0] sm:$0xf]
  %v849 = vld [vmem:[%s803 + $0xb4] sm:$0xf]
  %v850 = vld [vmem:[%s803 + $0xb8] sm:$0xf]
  %v851 = vld [vmem:[%s803 + $0xbc] sm:$0xf]
  %v852 = vld [vmem:[%s803 + $0xc0] sm:$0xf]
  %v853 = vld [vmem:[%s803 + $0xc4] sm:$0xf]
  %v854 = vld [vmem:[%s803 + $0xc8] sm:$0xf]
  %v855 = vld [vmem:[%s803 + $0xcc] sm:$0xf]
  %v856 = vld [vmem:[%s803 + $0xd0] sm:$0xf]
  %v857 = vld [vmem:[%s803 + $0xd4] sm:$0xf]
  %v858 = vld [vmem:[%s803 + $0xd8] sm:$0xf]
  %v859 = vld [vmem:[%s803 + $0xdc] sm:$0xf]
  %v860 = vld [vmem:[%s803 + $0xe0] sm:$0xf]
  %v861 = vld [vmem:[%s803 + $0xe4] sm:$0xf]
  %v862 = vld [vmem:[%s803 + $0xe8] sm:$0xf]
  %v863 = vld [vmem:[%s803 + $0xec] sm:$0xf]
  %v864 = vld [vmem:[%s803 + $0xf0] sm:$0xf]
  %v865 = vld [vmem:[%s803 + $0xf4] sm:$0xf]
  %v866 = vld [vmem:[%s803 + $0xf8] sm:$0xf]
  %v867 = vld [vmem:[%s803 + $0xfc] sm:$0xf]
  %v868 = vld [vmem:[%s803 + $0x100] sm:$0xf]
  %v869 = vld [vmem:[%s803 + $0x104] sm:$0xf]
  %v870 = vld [vmem:[%s803 + $0x108] sm:$0xf]
  %v871 = vld [vmem:[%s803 + $0x10c] sm:$0xf]
  %v872 = vld [vmem:[%s803 + $0x110] sm:$0xf]
  %v873 = vld [vmem:[%s803 + $0x114] sm:$0xf]
  %v874 = vld [vmem:[%s803 + $0x118] sm:$0xf]
  %v875 = vld [vmem:[%s803 + $0x11c] sm:$0xf]
  %v876 = vld [vmem:[%s803 + $0x120] sm:$0xf]
  %v877 = vld [vmem:[%s803 + $0x124] sm:$0xf]
  %v878 = vld [vmem:[%s803 + $0x128] sm:$0xf]
  %v879 = vld [vmem:[%s803 + $0x12c] sm:$0xf]
  %v880 = vld [vmem:[%s803 + $0x130] sm:$0xf]
  %v881 = vld [vmem:[%s803 + $0x134] sm:$0xf]
  %v882 = vld [vmem:[%s803 + $0x138] sm:$0xf]
  %v883 = vld [vmem:[%s803 + $0x13c] sm:$0xf]
  %v884 = vld [vmem:[%s803 + $0x140] sm:$0xf]
  %v885 = vld [vmem:[%s803 + $0x144] sm:$0xf]
  %v886 = vld [vmem:[%s803 + $0x148] sm:$0xf]
  %v887 = vld [vmem:[%s803 + $0x14c] sm:$0xf]
  %v888 = vld [vmem:[%s803 + $0x150] sm:$0xf]
  %v889 = vld [vmem:[%s803 + $0x154] sm:$0xf]
  %v890 = vld [vmem:[%s803 + $0x158] sm:$0xf]
  %v891 = vld [vmem:[%s803 + $0x15c] sm:$0xf]
  %v892 = vld [vmem:[%s803 + $0x160] sm:$0xf]
  %v893 = vld [vmem:[%s803 + $0x164] sm:$0xf]
  %v894 = vld [vmem:[%s803 + $0x168] sm:$0xf]
  %v895 = vld [vmem:[%s803 + $0x16c] sm:$0xf]
  %v896 = vld [vmem:[%s803 + $0x170] sm:$0xf]
  %v897 = vld [vmem:[%s803 + $0x174] sm:$0xf]
  %v898 = vld [vmem:[%s803 + $0x178] sm:$0xf]
  %v899 = vld [vmem:[%s803 + $0x17c] sm:$0xf]
  %v900 = vld [vmem:[%s803 + $0x180] sm:$0xf]
  %v901 = vld [vmem:[%s803 + $0x184] sm:$0xf]
  %v902 = vld [vmem:[%s803 + $0x188] sm:$0xf]
  %v903 = vld [vmem:[%s803 + $0x18c] sm:$0xf]
  %v1004 = vunpack.c.l.b16 %v804
  %v1005 = vunpack.c.l.b16 %v805
  %v1006 = vunpack.c.l.b16 %v806
  %v1007 = vunpack.c.l.b16 %v807
  %v1008 = vunpack.c.l.b16 %v808
  %v1009 = vunpack.c.l.b16 %v809
  %v1010 = vunpack.c.l.b16 %v810
  %v1011 = vunpack.c.l.b16 %v811
  %v1012 = vunpack.c.l.b16 %v812
  %v1013 = vunpack.c.l.b16 %v813
  %v1014 = vunpack.c.l.b16 %v814
  %v1015 = vunpack.c.l.b16 %v815
  %v1016 = vunpack.c.l.b16 %v816
  %v1017 = vunpack.c.l.b16 %v817
  %v1018 = vunpack.c.l.b16 %v818
  %v1019 = vunpack.c.l.b16 %v819
  %v1020 = vunpack.c.l.b16 %v820
  %v1021 = vunpack.c.l.b16 %v821
  %v1022 = vunpack.c.l.b16 %v822
  %v1023 = vunpack.c.l.b16 %v823
  %v1024 = vunpack.c.l.b16 %v824
  %v1025 = vunpack.c.l.b16 %v825
  %v1026 = vunpack.c.l.b16 %v826
  %v1027 = vunpack.c.l.b16 %v827
  %v1028 = vunpack.c.l.b16 %v828
  %v1029 = vunpack.c.l.b16 %v829
  %v1030 = vunpack.c.l.b16 %v830
  %v1031 = vunpack.c.l.b16 %v831
  %v1032 = vunpack.c.l.b16 %v832
  %v1033 = vunpack.c.l.b16 %v833
  %v1034 = vunpack.c.l.b16 %v834
  %v1035 = vunpack.c.l.b16 %v835
  %v1036 = vunpack.c.l.b16 %v836
  %v1037 = vunpack.c.l.b16 %v837
  %v1038 = vunpack.c.l.b16 %v838
  %v1039 = vunpack.c.l.b16 %v839
  %v1040 = vunpack.c.l.b16 %v840
  %v1041 = vunpack.c.l.b16 %v841
  %v1042 = vunpack.c.l.b16 %v842
  %v1043 = vunpack.c.l.b16 %v843
  %v1044 = vunpack.c.l.b16 %v844
  %v1045 = vunpack.c.l.b16 %v845
  %v1046 = vunpack.c.l.b16 %v846
  %v1047 = vunpack.c.l.b16 %v847
  %v1048 = vunpack.c.l.b16 %v848
  %v1049 = vunpack.c.l.b16 %v849
  %v1050 = vunpack.c.l.b16 %v850
  %v1051 = vunpack.c.l.b16 %v851
  %v1052 = vunpack.c.l.b16 %v852
  %v1053 = vunpack.c.l.b16 %v853
  %v1054 = vunpack.c.l.b16 %v854
  %v1055 = vunpack.c.l.b16 %v855
  %v1056 = vunpack.c.l.b16 %v856
  %v1057 = vunpack.c.l.b16 %v857
  %v1058 = vunpack.c.l.b16 %v858
  %v1059 = vunpack.c.l.b16 %v859
  %v1060 = vunpack.c.l.b16 %v860
  %v1061 = vunpack.c.l.b16 %v861
  %v1062 = vunpack.c.l.b16 %v862
  %v1063 = vunpack.c.l.b16 %v863
  %v1064 = vunpack.c.l.b16 %v864
  %v1065 = vunpack.c.l.b16 %v865
  %v1066 = vunpack.c.l.b16 %v866
  %v1067 = vunpack.c.l.b16 %v867
  %v1068 = vunpack.c.l.b16 %v868
  %v1069 = vunpack.c.l.b16 %v869
  %v1070 = vunpack.c.l.b16 %v870
  %v1071 = vunpack.c.l.b16 %v871
  %v1072 = vunpack.c.l.b16 %v872
  %v1073 = vunpack.c.l.b16 %v873
  %v1074 = vunpack.c.l.b16 %v874
  %v1075 = vunpack.c.l.b16 %v875
  %v1076 = vunpack.c.l.b16 %v876
  %v1077 = vunpack.c.l.b16 %v877
  %v1078 = vunpack.c.l.b16 %v878
  %v1079 = vunpack.c.l.b16 %v879
  %v1080 = vunpack.c.l.b16 %v880
  %v1081 = vunpack.c.l.b16 %v881
  %v1082 = vunpack.c.l.b16 %v882
  %v1083 = vunpack.c.l.b16 %v883
  %v1084 = vunpack.c.l.b16 %v884
  %v1085 = vunpack.c.l.b16 %v885
  %v1086 = vunpack.c.l.b16 %v886
  %v1087 = vunpack.c.l.b16 %v887
  %v1088 = vunpack.c.l.b16 %v888
  %v1089 = vunpack.c.l.b16 %v889
  %v1090 = vunpack.c.l.b16 %v890
  %v1091 = vunpack.c.l.b16 %v891
  %v1092 = vunpack.c.l.b16 %v892
  %v1093 = vunpack.c.l.b16 %v893
  %v1094 = vunpack.c.l.b16 %v894
  %v1095 = vunpack.c.l.b16 %v895
  %v1096 = vunpack.c.l.b16 %v896
  %v1097 = vunpack.c.l.b16 %v897
  %v1098 = vunpack.c.l.b16 %v898
  %v1099 = vunpack.c.l.b16 %v899
  %v1100 = vunpack.c.l.b16 %v900
  %v1101 = vunpack.c.l.b16 %v901
  %v1102 = vunpack.c.l.b16 %v902
  %v1103 = vunpack.c.l.b16 %v903
  %v1104 = vpack.c.b16 %v1005, %v1004
  %v1105 = vpack.c.b16 %v1007, %v1006
  %v1106 = vpack.c.b16 %v1009, %v1008
  %v1107 = vpack.c.b16 %v1011, %v1010
  %v1108 = vpack.c.b16 %v1013, %v1012
  %v1109 = vpack.c.b16 %v1015, %v1014
  %v1110 = vpack.c.b16 %v1017, %v1016
  %v1111 = vpack.c.b16 %v1019, %v1018
  %v1112 = vpack.c.b16 %v1021, %v1020
  %v1113 = vpack.c.b16 %v1023, %v1022
  %v1114 = vpack.c.b16 %v1025, %v1024
  %v1115 = vpack.c.b16 %v1027, %v1026
  %v1116 = vpack.c.b16 %v1029, %v1028
  %v1117 = vpack.c.b16 %v1031, %v1030
  %v1118 = vpack.c.b16 %v1033, %v1032
  %v1119 = vpack.c.b16 %v1035, %v1034
  %v1120 = vpack.c.b16 %v1037, %v1036
  %v1121 = vpack.c.b16 %v1039, %v1038
  %v1122 = vpack.c.b16 %v1041, %v1040
  %v1123 = vpack.c.b16 %v1043, %v1042
  %v1124 = vpack.c.b16 %v1045, %v1044
  %v1125 = vpack.c.b16 %v1047, %v1046
  %v1126 = vpack.c.b16 %v1049, %v1048
  %v1127 = vpack.c.b16 %v1051, %v1050
  %v1128 = vpack.c.b16 %v1053, %v1052
  %v1129 = vpack.c.b16 %v1055, %v1054
  %v1130 = vpack.c.b16 %v1057, %v1056
  %v1131 = vpack.c.b16 %v1059, %v1058
  %v1132 = vpack.c.b16 %v1061, %v1060
  %v1133 = vpack.c.b16 %v1063, %v1062
  %v1134 = vpack.c.b16 %v1065, %v1064
  %v1135 = vpack.c.b16 %v1067, %v1066
  %v1136 = vpack.c.b16 %v1069, %v1068
  %v1137 = vpack.c.b16 %v1071, %v1070
  %v1138 = vpack.c.b16 %v1073, %v1072
  %v1139 = vpack.c.b16 %v1075, %v1074
  %v1140 = vpack.c.b16 %v1077, %v1076
  %v1141 = vpack.c.b16 %v1079, %v1078
  %v1142 = vpack.c.b16 %v1081, %v1080
  %v1143 = vpack.c.b16 %v1083, %v1082
  %v1144 = vpack.c.b16 %v1085, %v1084
  %v1145 = vpack.c.b16 %v1087, %v1086
  %v1146 = vpack.c.b16 %v1089, %v1088
  %v1147 = vpack.c.b16 %v1091, %v1090
  %v1148 = vpack.c.b16 %v1093, %v1092
  %v1149 = vpack.c.b16 %v1095, %v1094
  %v1150 = vpack.c.b16 %v1097, %v1096
  %v1151 = vpack.c.b16 %v1099, %v1098
  %v1152 = vpack.c.b16 %v1101, %v1100
  %v1153 = vpack.c.b16 %v1103, %v1102
  %1204 = vmatpush.bf16.msra.mxu0 %v1111
  %1205 = vmatpush.bf16.msra.mxu0 %v1110
  %1206 = vmatpush.bf16.msra.mxu0 %v1109
  %1207 = vmatpush.bf16.msra.mxu0 %v1108
  %1208 = vmatpush.bf16.msra.mxu0 %v1107
  %1209 = vmatpush.bf16.msra.mxu0 %v1106
  %1210 = vmatpush.bf16.msra.mxu0 %v1105
  %1211 = vmatpush.bf16.msra.mxu0 %v1104
  %1212 = vmatmul.bf16.gmra.mxu0 %v235
  %v1213 = vpop.f32.mrf.mxu0
  %v1214 = vadd.f32 0.0, %v1213
  %v1215 = vpop.f32.mrf.mxu0
  %v1216 = vadd.f32 0.0, %v1215
  %1217 = vmatmul.bf16.gmra.mxu0 %v242
  %v1218 = vpop.f32.mrf.mxu0
  %v1219 = vadd.f32 0.0, %v1218
  %v1220 = vpop.f32.mrf.mxu0
  %v1221 = vadd.f32 0.0, %v1220
  %1222 = vmatmul.bf16.gmra.mxu0 %v249
  %v1223 = vpop.f32.mrf.mxu0
  %v1224 = vadd.f32 0.0, %v1223
  %v1225 = vpop.f32.mrf.mxu0
  %v1226 = vadd.f32 0.0, %v1225
  %1227 = vmatmul.bf16.gmra.mxu0 %v256
  %v1228 = vpop.f32.mrf.mxu0
  %v1229 = vadd.f32 0.0, %v1228
  %v1230 = vpop.f32.mrf.mxu0
  %v1231 = vadd.f32 0.0, %v1230
  %1232 = vdwg.mxu0
  %1233 = vmatpush.bf16.msra.mxu0 %v1119
  %1234 = vmatpush.bf16.msra.mxu0 %v1118
  %1235 = vmatpush.bf16.msra.mxu0 %v1117
  %1236 = vmatpush.bf16.msra.mxu0 %v1116
  %1237 = vmatpush.bf16.msra.mxu0 %v1115
  %1238 = vmatpush.bf16.msra.mxu0 %v1114
  %1239 = vmatpush.bf16.msra.mxu0 %v1113
  %1240 = vmatpush.bf16.msra.mxu0 %v1112
  %1241 = vmatmul.bf16.gmra.mxu0 %v236
  %v1242 = vpop.f32.mrf.mxu0
  %v1243 = vadd.f32 %v1214, %v1242
  %v1244 = vpop.f32.mrf.mxu0
  %v1245 = vadd.f32 %v1216, %v1244
  %1246 = vmatmul.bf16.gmra.mxu0 %v243
  %v1247 = vpop.f32.mrf.mxu0
  %v1248 = vadd.f32 %v1219, %v1247
  %v1249 = vpop.f32.mrf.mxu0
  %v1250 = vadd.f32 %v1221, %v1249
  %1251 = vmatmul.bf16.gmra.mxu0 %v250
  %v1252 = vpop.f32.mrf.mxu0
  %v1253 = vadd.f32 %v1224, %v1252
  %v1254 = vpop.f32.mrf.mxu0
  %v1255 = vadd.f32 %v1226, %v1254
  %1256 = vmatmul.bf16.gmra.mxu0 %v257
  %v1257 = vpop.f32.mrf.mxu0
  %v1258 = vadd.f32 %v1229, %v1257
  %v1259 = vpop.f32.mrf.mxu0
  %v1260 = vadd.f32 %v1231, %v1259
  %1261 = vdwg.mxu0
  %1262 = vmatpush.bf16.msra.mxu0 %v1127
  %1263 = vmatpush.bf16.msra.mxu0 %v1126
  %1264 = vmatpush.bf16.msra.mxu0 %v1125
  %1265 = vmatpush.bf16.msra.mxu0 %v1124
  %1266 = vmatpush.bf16.msra.mxu0 %v1123
  %1267 = vmatpush.bf16.msra.mxu0 %v1122
  %1268 = vmatpush.bf16.msra.mxu0 %v1121
  %1269 = vmatpush.bf16.msra.mxu0 %v1120
  %1270 = vmatmul.bf16.gmra.mxu0 %v237
  %v1271 = vpop.f32.mrf.mxu0
  %v1272 = vadd.f32 %v1243, %v1271
  %v1273 = vpop.f32.mrf.mxu0
  %v1274 = vadd.f32 %v1245, %v1273
  %1275 = vmatmul.bf16.gmra.mxu0 %v244
  %v1276 = vpop.f32.mrf.mxu0
  %v1277 = vadd.f32 %v1248, %v1276
  %v1278 = vpop.f32.mrf.mxu0
  %v1279 = vadd.f32 %v1250, %v1278
  %1280 = vmatmul.bf16.gmra.mxu0 %v251
  %v1281 = vpop.f32.mrf.mxu0
  %v1282 = vadd.f32 %v1253, %v1281
  %v1283 = vpop.f32.mrf.mxu0
  %v1284 = vadd.f32 %v1255, %v1283
  %1285 = vmatmul.bf16.gmra.mxu0 %v258
  %v1286 = vpop.f32.mrf.mxu0
  %v1287 = vadd.f32 %v1258, %v1286
  %v1288 = vpop.f32.mrf.mxu0
  %v1289 = vadd.f32 %v1260, %v1288
  %1290 = vdwg.mxu0
  %1291 = vmatpush.bf16.msra.mxu0 %v1135
  %1292 = vmatpush.bf16.msra.mxu0 %v1134
  %1293 = vmatpush.bf16.msra.mxu0 %v1133
  %1294 = vmatpush.bf16.msra.mxu0 %v1132
  %1295 = vmatpush.bf16.msra.mxu0 %v1131
  %1296 = vmatpush.bf16.msra.mxu0 %v1130
  %1297 = vmatpush.bf16.msra.mxu0 %v1129
  %1298 = vmatpush.bf16.msra.mxu0 %v1128
  %1299 = vmatmul.bf16.gmra.mxu0 %v238
  %v1300 = vpop.f32.mrf.mxu0
  %v1301 = vadd.f32 %v1272, %v1300
  %v1302 = vpop.f32.mrf.mxu0
  %v1303 = vadd.f32 %v1274, %v1302
  %1304 = vmatmul.bf16.gmra.mxu0 %v245
  %v1305 = vpop.f32.mrf.mxu0
  %v1306 = vadd.f32 %v1277, %v1305
  %v1307 = vpop.f32.mrf.mxu0
  %v1308 = vadd.f32 %v1279, %v1307
  %1309 = vmatmul.bf16.gmra.mxu0 %v252
  %v1310 = vpop.f32.mrf.mxu0
  %v1311 = vadd.f32 %v1282, %v1310
  %v1312 = vpop.f32.mrf.mxu0
  %v1313 = vadd.f32 %v1284, %v1312
  %1314 = vmatmul.bf16.gmra.mxu0 %v259
  %v1315 = vpop.f32.mrf.mxu0
  %v1316 = vadd.f32 %v1287, %v1315
  %v1317 = vpop.f32.mrf.mxu0
  %v1318 = vadd.f32 %v1289, %v1317
  %1319 = vdwg.mxu0
  %1320 = vmatpush.bf16.msra.mxu0 %v1143
  %1321 = vmatpush.bf16.msra.mxu0 %v1142
  %1322 = vmatpush.bf16.msra.mxu0 %v1141
  %1323 = vmatpush.bf16.msra.mxu0 %v1140
  %1324 = vmatpush.bf16.msra.mxu0 %v1139
  %1325 = vmatpush.bf16.msra.mxu0 %v1138
  %1326 = vmatpush.bf16.msra.mxu0 %v1137
  %1327 = vmatpush.bf16.msra.mxu0 %v1136
  %1328 = vmatmul.bf16.gmra.mxu0 %v239
  %v1329 = vpop.f32.mrf.mxu0
  %v1330 = vadd.f32 %v1301, %v1329
  %v1331 = vpop.f32.mrf.mxu0
  %v1332 = vadd.f32 %v1303, %v1331
  %1333 = vmatmul.bf16.gmra.mxu0 %v246
  %v1334 = vpop.f32.mrf.mxu0
  %v1335 = vadd.f32 %v1306, %v1334
  %v1336 = vpop.f32.mrf.mxu0
  %v1337 = vadd.f32 %v1308, %v1336
  %1338 = vmatmul.bf16.gmra.mxu0 %v253
  %v1339 = vpop.f32.mrf.mxu0
  %v1340 = vadd.f32 %v1311, %v1339
  %v1341 = vpop.f32.mrf.mxu0
  %v1342 = vadd.f32 %v1313, %v1341
  %1343 = vmatmul.bf16.gmra.mxu0 %v260
  %v1344 = vpop.f32.mrf.mxu0
  %v1345 = vadd.f32 %v1316, %v1344
  %v1346 = vpop.f32.mrf.mxu0
  %v1347 = vadd.f32 %v1318, %v1346
  %1348 = vdwg.mxu0
  %1349 = vmatpush.bf16.msra.mxu0 %v1151
  %1350 = vmatpush.bf16.msra.mxu0 %v1150
  %1351 = vmatpush.bf16.msra.mxu0 %v1149
  %1352 = vmatpush.bf16.msra.mxu0 %v1148
  %1353 = vmatpush.bf16.msra.mxu0 %v1147
  %1354 = vmatpush.bf16.msra.mxu0 %v1146
  %1355 = vmatpush.bf16.msra.mxu0 %v1145
  %1356 = vmatpush.bf16.msra.mxu0 %v1144
  %1357 = vmatmul.bf16.gmra.mxu0 %v240
  %v1358 = vpop.f32.mrf.mxu0
  %v1359 = vadd.f32 %v1330, %v1358
  %v1360 = vpop.f32.mrf.mxu0
  %v1361 = vadd.f32 %v1332, %v1360
  %1362 = vmatmul.bf16.gmra.mxu0 %v247
  %v1363 = vpop.f32.mrf.mxu0
  %v1364 = vadd.f32 %v1335, %v1363
  %v1365 = vpop.f32.mrf.mxu0
  %v1366 = vadd.f32 %v1337, %v1365
  %1367 = vmatmul.bf16.gmra.mxu0 %v254
  %v1368 = vpop.f32.mrf.mxu0
  %v1369 = vadd.f32 %v1340, %v1368
  %v1370 = vpop.f32.mrf.mxu0
  %v1371 = vadd.f32 %v1342, %v1370
  %1372 = vmatmul.bf16.gmra.mxu0 %v261
  %v1373 = vpop.f32.mrf.mxu0
  %v1374 = vadd.f32 %v1345, %v1373
  %v1375 = vpop.f32.mrf.mxu0
  %v1376 = vadd.f32 %v1347, %v1375
  %1377 = vdwg.mxu0
  %1378 = vmatpush.bf16.msra.mxu0 0
  %1379 = vmatpush.bf16.msra.mxu0 0
  %1380 = vmatpush.bf16.msra.mxu0 0
  %1381 = vmatpush.bf16.msra.mxu0 0
  %1382 = vmatpush.bf16.msra.mxu0 0
  %1383 = vmatpush.bf16.msra.mxu0 0
  %1384 = vmatpush.bf16.msra.mxu0 %v1153
  %1385 = vmatpush.bf16.msra.mxu0 %v1152
  %1386 = vmatmul.bf16.gmra.mxu0 %v589
  %v1387 = vpop.f32.mrf.mxu0
  %v1388 = vadd.f32 %v1359, %v1387
  %v1389 = vpop.f32.mrf.mxu0
  %v1390 = vadd.f32 %v1361, %v1389
  %1391 = vmatmul.bf16.gmra.mxu0 %v592
  %v1392 = vpop.f32.mrf.mxu0
  %v1393 = vadd.f32 %v1364, %v1392
  %v1394 = vpop.f32.mrf.mxu0
  %v1395 = vadd.f32 %v1366, %v1394
  %1396 = vmatmul.bf16.gmra.mxu0 %v595
  %v1397 = vpop.f32.mrf.mxu0
  %v1398 = vadd.f32 %v1369, %v1397
  %v1399 = vpop.f32.mrf.mxu0
  %v1400 = vadd.f32 %v1371, %v1399
  %1401 = vmatmul.bf16.gmra.mxu0 %v598
  %v1402 = vpop.f32.mrf.mxu0
  %v1403 = vadd.f32 %v1374, %v1402
  %v1404 = vpop.f32.mrf.mxu0
  %v1405 = vadd.f32 %v1376, %v1404
  %1406 = vdwg.mxu0
  %s1407 = scalar_lea.vmem %s2, 800
  %v1408 = vld [vmem:[%s1407] sm:$0xf]
  %v1409 = vld [vmem:[%s1407 + $0x4] sm:$0xf]
  %v1410 = vld [vmem:[%s1407 + $0x8] sm:$0xf]
  %v1411 = vld [vmem:[%s1407 + $0xc] sm:$0xf]
  %v1412 = vld [vmem:[%s1407 + $0x10] sm:$0xf]
  %v1413 = vld [vmem:[%s1407 + $0x14] sm:$0xf]
  %v1414 = vld [vmem:[%s1407 + $0x18] sm:$0xf]
  %v1415 = vld [vmem:[%s1407 + $0x1c] sm:$0xf]
  %v1416 = vld [vmem:[%s1407 + $0x20] sm:$0xf]
  %v1417 = vld [vmem:[%s1407 + $0x24] sm:$0xf]
  %v1418 = vld [vmem:[%s1407 + $0x28] sm:$0xf]
  %v1419 = vld [vmem:[%s1407 + $0x2c] sm:$0xf]
  %v1420 = vld [vmem:[%s1407 + $0x30] sm:$0xf]
  %v1421 = vld [vmem:[%s1407 + $0x34] sm:$0xf]
  %v1422 = vld [vmem:[%s1407 + $0x38] sm:$0xf]
  %v1423 = vld [vmem:[%s1407 + $0x3c] sm:$0xf]
  %v1424 = vld [vmem:[%s1407 + $0x40] sm:$0xf]
  %v1425 = vld [vmem:[%s1407 + $0x44] sm:$0xf]
  %v1426 = vld [vmem:[%s1407 + $0x48] sm:$0xf]
  %v1427 = vld [vmem:[%s1407 + $0x4c] sm:$0xf]
  %v1428 = vld [vmem:[%s1407 + $0x50] sm:$0xf]
  %v1429 = vld [vmem:[%s1407 + $0x54] sm:$0xf]
  %v1430 = vld [vmem:[%s1407 + $0x58] sm:$0xf]
  %v1431 = vld [vmem:[%s1407 + $0x5c] sm:$0xf]
  %v1432 = vld [vmem:[%s1407 + $0x60] sm:$0xf]
  %v1433 = vld [vmem:[%s1407 + $0x64] sm:$0xf]
  %v1434 = vld [vmem:[%s1407 + $0x68] sm:$0xf]
  %v1435 = vld [vmem:[%s1407 + $0x6c] sm:$0xf]
  %v1436 = vld [vmem:[%s1407 + $0x70] sm:$0xf]
  %v1437 = vld [vmem:[%s1407 + $0x74] sm:$0xf]
  %v1438 = vld [vmem:[%s1407 + $0x78] sm:$0xf]
  %v1439 = vld [vmem:[%s1407 + $0x7c] sm:$0xf]
  %v1440 = vld [vmem:[%s1407 + $0x80] sm:$0xf]
  %v1441 = vld [vmem:[%s1407 + $0x84] sm:$0xf]
  %v1442 = vld [vmem:[%s1407 + $0x88] sm:$0xf]
  %v1443 = vld [vmem:[%s1407 + $0x8c] sm:$0xf]
  %v1444 = vld [vmem:[%s1407 + $0x90] sm:$0xf]
  %v1445 = vld [vmem:[%s1407 + $0x94] sm:$0xf]
  %v1446 = vld [vmem:[%s1407 + $0x98] sm:$0xf]
  %v1447 = vld [vmem:[%s1407 + $0x9c] sm:$0xf]
  %v1448 = vld [vmem:[%s1407 + $0xa0] sm:$0xf]
  %v1449 = vld [vmem:[%s1407 + $0xa4] sm:$0xf]
  %v1450 = vld [vmem:[%s1407 + $0xa8] sm:$0xf]
  %v1451 = vld [vmem:[%s1407 + $0xac] sm:$0xf]
  %v1452 = vld [vmem:[%s1407 + $0xb0] sm:$0xf]
  %v1453 = vld [vmem:[%s1407 + $0xb4] sm:$0xf]
  %v1454 = vld [vmem:[%s1407 + $0xb8] sm:$0xf]
  %v1455 = vld [vmem:[%s1407 + $0xbc] sm:$0xf]
  %v1456 = vld [vmem:[%s1407 + $0xc0] sm:$0xf]
  %v1457 = vld [vmem:[%s1407 + $0xc4] sm:$0xf]
  %v1458 = vld [vmem:[%s1407 + $0xc8] sm:$0xf]
  %v1459 = vld [vmem:[%s1407 + $0xcc] sm:$0xf]
  %v1460 = vld [vmem:[%s1407 + $0xd0] sm:$0xf]
  %v1461 = vld [vmem:[%s1407 + $0xd4] sm:$0xf]
  %v1462 = vld [vmem:[%s1407 + $0xd8] sm:$0xf]
  %v1463 = vld [vmem:[%s1407 + $0xdc] sm:$0xf]
  %v1464 = vld [vmem:[%s1407 + $0xe0] sm:$0xf]
  %v1465 = vld [vmem:[%s1407 + $0xe4] sm:$0xf]
  %v1466 = vld [vmem:[%s1407 + $0xe8] sm:$0xf]
  %v1467 = vld [vmem:[%s1407 + $0xec] sm:$0xf]
  %v1468 = vld [vmem:[%s1407 + $0xf0] sm:$0xf]
  %v1469 = vld [vmem:[%s1407 + $0xf4] sm:$0xf]
  %v1470 = vld [vmem:[%s1407 + $0xf8] sm:$0xf]
  %v1471 = vld [vmem:[%s1407 + $0xfc] sm:$0xf]
  %v1472 = vld [vmem:[%s1407 + $0x100] sm:$0xf]
  %v1473 = vld [vmem:[%s1407 + $0x104] sm:$0xf]
  %v1474 = vld [vmem:[%s1407 + $0x108] sm:$0xf]
  %v1475 = vld [vmem:[%s1407 + $0x10c] sm:$0xf]
  %v1476 = vld [vmem:[%s1407 + $0x110] sm:$0xf]
  %v1477 = vld [vmem:[%s1407 + $0x114] sm:$0xf]
  %v1478 = vld [vmem:[%s1407 + $0x118] sm:$0xf]
  %v1479 = vld [vmem:[%s1407 + $0x11c] sm:$0xf]
  %v1480 = vld [vmem:[%s1407 + $0x120] sm:$0xf]
  %v1481 = vld [vmem:[%s1407 + $0x124] sm:$0xf]
  %v1482 = vld [vmem:[%s1407 + $0x128] sm:$0xf]
  %v1483 = vld [vmem:[%s1407 + $0x12c] sm:$0xf]
  %v1484 = vld [vmem:[%s1407 + $0x130] sm:$0xf]
  %v1485 = vld [vmem:[%s1407 + $0x134] sm:$0xf]
  %v1486 = vld [vmem:[%s1407 + $0x138] sm:$0xf]
  %v1487 = vld [vmem:[%s1407 + $0x13c] sm:$0xf]
  %v1488 = vld [vmem:[%s1407 + $0x140] sm:$0xf]
  %v1489 = vld [vmem:[%s1407 + $0x144] sm:$0xf]
  %v1490 = vld [vmem:[%s1407 + $0x148] sm:$0xf]
  %v1491 = vld [vmem:[%s1407 + $0x14c] sm:$0xf]
  %v1492 = vld [vmem:[%s1407 + $0x150] sm:$0xf]
  %v1493 = vld [vmem:[%s1407 + $0x154] sm:$0xf]
  %v1494 = vld [vmem:[%s1407 + $0x158] sm:$0xf]
  %v1495 = vld [vmem:[%s1407 + $0x15c] sm:$0xf]
  %v1496 = vld [vmem:[%s1407 + $0x160] sm:$0xf]
  %v1497 = vld [vmem:[%s1407 + $0x164] sm:$0xf]
  %v1498 = vld [vmem:[%s1407 + $0x168] sm:$0xf]
  %v1499 = vld [vmem:[%s1407 + $0x16c] sm:$0xf]
  %v1500 = vld [vmem:[%s1407 + $0x170] sm:$0xf]
  %v1501 = vld [vmem:[%s1407 + $0x174] sm:$0xf]
  %v1502 = vld [vmem:[%s1407 + $0x178] sm:$0xf]
  %v1503 = vld [vmem:[%s1407 + $0x17c] sm:$0xf]
  %v1504 = vld [vmem:[%s1407 + $0x180] sm:$0xf]
  %v1505 = vld [vmem:[%s1407 + $0x184] sm:$0xf]
  %v1506 = vld [vmem:[%s1407 + $0x188] sm:$0xf]
  %v1507 = vld [vmem:[%s1407 + $0x18c] sm:$0xf]
  %v1608 = vunpack.c.l.b16 %v1408
  %v1609 = vunpack.c.l.b16 %v1409
  %v1610 = vunpack.c.l.b16 %v1410
  %v1611 = vunpack.c.l.b16 %v1411
  %v1612 = vunpack.c.l.b16 %v1412
  %v1613 = vunpack.c.l.b16 %v1413
  %v1614 = vunpack.c.l.b16 %v1414
  %v1615 = vunpack.c.l.b16 %v1415
  %v1616 = vunpack.c.l.b16 %v1416
  %v1617 = vunpack.c.l.b16 %v1417
  %v1618 = vunpack.c.l.b16 %v1418
  %v1619 = vunpack.c.l.b16 %v1419
  %v1620 = vunpack.c.l.b16 %v1420
  %v1621 = vunpack.c.l.b16 %v1421
  %v1622 = vunpack.c.l.b16 %v1422
  %v1623 = vunpack.c.l.b16 %v1423
  %v1624 = vunpack.c.l.b16 %v1424
  %v1625 = vunpack.c.l.b16 %v1425
  %v1626 = vunpack.c.l.b16 %v1426
  %v1627 = vunpack.c.l.b16 %v1427
  %v1628 = vunpack.c.l.b16 %v1428
  %v1629 = vunpack.c.l.b16 %v1429
  %v1630 = vunpack.c.l.b16 %v1430
  %v1631 = vunpack.c.l.b16 %v1431
  %v1632 = vunpack.c.l.b16 %v1432
  %v1633 = vunpack.c.l.b16 %v1433
  %v1634 = vunpack.c.l.b16 %v1434
  %v1635 = vunpack.c.l.b16 %v1435
  %v1636 = vunpack.c.l.b16 %v1436
  %v1637 = vunpack.c.l.b16 %v1437
  %v1638 = vunpack.c.l.b16 %v1438
  %v1639 = vunpack.c.l.b16 %v1439
  %v1640 = vunpack.c.l.b16 %v1440
  %v1641 = vunpack.c.l.b16 %v1441
  %v1642 = vunpack.c.l.b16 %v1442
  %v1643 = vunpack.c.l.b16 %v1443
  %v1644 = vunpack.c.l.b16 %v1444
  %v1645 = vunpack.c.l.b16 %v1445
  %v1646 = vunpack.c.l.b16 %v1446
  %v1647 = vunpack.c.l.b16 %v1447
  %v1648 = vunpack.c.l.b16 %v1448
  %v1649 = vunpack.c.l.b16 %v1449
  %v1650 = vunpack.c.l.b16 %v1450
  %v1651 = vunpack.c.l.b16 %v1451
  %v1652 = vunpack.c.l.b16 %v1452
  %v1653 = vunpack.c.l.b16 %v1453
  %v1654 = vunpack.c.l.b16 %v1454
  %v1655 = vunpack.c.l.b16 %v1455
  %v1656 = vunpack.c.l.b16 %v1456
  %v1657 = vunpack.c.l.b16 %v1457
  %v1658 = vunpack.c.l.b16 %v1458
  %v1659 = vunpack.c.l.b16 %v1459
  %v1660 = vunpack.c.l.b16 %v1460
  %v1661 = vunpack.c.l.b16 %v1461
  %v1662 = vunpack.c.l.b16 %v1462
  %v1663 = vunpack.c.l.b16 %v1463
  %v1664 = vunpack.c.l.b16 %v1464
  %v1665 = vunpack.c.l.b16 %v1465
  %v1666 = vunpack.c.l.b16 %v1466
  %v1667 = vunpack.c.l.b16 %v1467
  %v1668 = vunpack.c.l.b16 %v1468
  %v1669 = vunpack.c.l.b16 %v1469
  %v1670 = vunpack.c.l.b16 %v1470
  %v1671 = vunpack.c.l.b16 %v1471
  %v1672 = vunpack.c.l.b16 %v1472
  %v1673 = vunpack.c.l.b16 %v1473
  %v1674 = vunpack.c.l.b16 %v1474
  %v1675 = vunpack.c.l.b16 %v1475
  %v1676 = vunpack.c.l.b16 %v1476
  %v1677 = vunpack.c.l.b16 %v1477
  %v1678 = vunpack.c.l.b16 %v1478
  %v1679 = vunpack.c.l.b16 %v1479
  %v1680 = vunpack.c.l.b16 %v1480
  %v1681 = vunpack.c.l.b16 %v1481
  %v1682 = vunpack.c.l.b16 %v1482
  %v1683 = vunpack.c.l.b16 %v1483
  %v1684 = vunpack.c.l.b16 %v1484
  %v1685 = vunpack.c.l.b16 %v1485
  %v1686 = vunpack.c.l.b16 %v1486
  %v1687 = vunpack.c.l.b16 %v1487
  %v1688 = vunpack.c.l.b16 %v1488
  %v1689 = vunpack.c.l.b16 %v1489
  %v1690 = vunpack.c.l.b16 %v1490
  %v1691 = vunpack.c.l.b16 %v1491
  %v1692 = vunpack.c.l.b16 %v1492
  %v1693 = vunpack.c.l.b16 %v1493
  %v1694 = vunpack.c.l.b16 %v1494
  %v1695 = vunpack.c.l.b16 %v1495
  %v1696 = vunpack.c.l.b16 %v1496
  %v1697 = vunpack.c.l.b16 %v1497
  %v1698 = vunpack.c.l.b16 %v1498
  %v1699 = vunpack.c.l.b16 %v1499
  %v1700 = vunpack.c.l.b16 %v1500
  %v1701 = vunpack.c.l.b16 %v1501
  %v1702 = vunpack.c.l.b16 %v1502
  %v1703 = vunpack.c.l.b16 %v1503
  %v1704 = vunpack.c.l.b16 %v1504
  %v1705 = vunpack.c.l.b16 %v1505
  %v1706 = vunpack.c.l.b16 %v1506
  %v1707 = vunpack.c.l.b16 %v1507
  %v1708 = vpack.c.b16 %v1609, %v1608
  %v1709 = vpack.c.b16 %v1611, %v1610
  %v1710 = vpack.c.b16 %v1613, %v1612
  %v1711 = vpack.c.b16 %v1615, %v1614
  %v1712 = vpack.c.b16 %v1617, %v1616
  %v1713 = vpack.c.b16 %v1619, %v1618
  %v1714 = vpack.c.b16 %v1621, %v1620
  %v1715 = vpack.c.b16 %v1623, %v1622
  %v1716 = vpack.c.b16 %v1625, %v1624
  %v1717 = vpack.c.b16 %v1627, %v1626
  %v1718 = vpack.c.b16 %v1629, %v1628
  %v1719 = vpack.c.b16 %v1631, %v1630
  %v1720 = vpack.c.b16 %v1633, %v1632
  %v1721 = vpack.c.b16 %v1635, %v1634
  %v1722 = vpack.c.b16 %v1637, %v1636
  %v1723 = vpack.c.b16 %v1639, %v1638
  %v1724 = vpack.c.b16 %v1641, %v1640
  %v1725 = vpack.c.b16 %v1643, %v1642
  %v1726 = vpack.c.b16 %v1645, %v1644
  %v1727 = vpack.c.b16 %v1647, %v1646
  %v1728 = vpack.c.b16 %v1649, %v1648
  %v1729 = vpack.c.b16 %v1651, %v1650
  %v1730 = vpack.c.b16 %v1653, %v1652
  %v1731 = vpack.c.b16 %v1655, %v1654
  %v1732 = vpack.c.b16 %v1657, %v1656
  %v1733 = vpack.c.b16 %v1659, %v1658
  %v1734 = vpack.c.b16 %v1661, %v1660
  %v1735 = vpack.c.b16 %v1663, %v1662
  %v1736 = vpack.c.b16 %v1665, %v1664
  %v1737 = vpack.c.b16 %v1667, %v1666
  %v1738 = vpack.c.b16 %v1669, %v1668
  %v1739 = vpack.c.b16 %v1671, %v1670
  %v1740 = vpack.c.b16 %v1673, %v1672
  %v1741 = vpack.c.b16 %v1675, %v1674
  %v1742 = vpack.c.b16 %v1677, %v1676
  %v1743 = vpack.c.b16 %v1679, %v1678
  %v1744 = vpack.c.b16 %v1681, %v1680
  %v1745 = vpack.c.b16 %v1683, %v1682
  %v1746 = vpack.c.b16 %v1685, %v1684
  %v1747 = vpack.c.b16 %v1687, %v1686
  %v1748 = vpack.c.b16 %v1689, %v1688
  %v1749 = vpack.c.b16 %v1691, %v1690
  %v1750 = vpack.c.b16 %v1693, %v1692
  %v1751 = vpack.c.b16 %v1695, %v1694
  %v1752 = vpack.c.b16 %v1697, %v1696
  %v1753 = vpack.c.b16 %v1699, %v1698
  %v1754 = vpack.c.b16 %v1701, %v1700
  %v1755 = vpack.c.b16 %v1703, %v1702
  %v1756 = vpack.c.b16 %v1705, %v1704
  %v1757 = vpack.c.b16 %v1707, %v1706
  %1808 = vmatpush.bf16.msra.mxu0 %v1715
  %1809 = vmatpush.bf16.msra.mxu0 %v1714
  %1810 = vmatpush.bf16.msra.mxu0 %v1713
  %1811 = vmatpush.bf16.msra.mxu0 %v1712
  %1812 = vmatpush.bf16.msra.mxu0 %v1711
  %1813 = vmatpush.bf16.msra.mxu0 %v1710
  %1814 = vmatpush.bf16.msra.mxu0 %v1709
  %1815 = vmatpush.bf16.msra.mxu0 %v1708
  %1816 = vmatmul.bf16.gmra.mxu0 %v235
  %v1817 = vpop.f32.mrf.mxu0
  %v1818 = vadd.f32 0.0, %v1817
  %v1819 = vpop.f32.mrf.mxu0
  %v1820 = vadd.f32 0.0, %v1819
  %1821 = vmatmul.bf16.gmra.mxu0 %v242
  %v1822 = vpop.f32.mrf.mxu0
  %v1823 = vadd.f32 0.0, %v1822
  %v1824 = vpop.f32.mrf.mxu0
  %v1825 = vadd.f32 0.0, %v1824
  %1826 = vmatmul.bf16.gmra.mxu0 %v249
  %v1827 = vpop.f32.mrf.mxu0
  %v1828 = vadd.f32 0.0, %v1827
  %v1829 = vpop.f32.mrf.mxu0
  %v1830 = vadd.f32 0.0, %v1829
  %1831 = vmatmul.bf16.gmra.mxu0 %v256
  %v1832 = vpop.f32.mrf.mxu0
  %v1833 = vadd.f32 0.0, %v1832
  %v1834 = vpop.f32.mrf.mxu0
  %v1835 = vadd.f32 0.0, %v1834
  %1836 = vdwg.mxu0
  %1837 = vmatpush.bf16.msra.mxu0 %v1723
  %1838 = vmatpush.bf16.msra.mxu0 %v1722
  %1839 = vmatpush.bf16.msra.mxu0 %v1721
  %1840 = vmatpush.bf16.msra.mxu0 %v1720
  %1841 = vmatpush.bf16.msra.mxu0 %v1719
  %1842 = vmatpush.bf16.msra.mxu0 %v1718
  %1843 = vmatpush.bf16.msra.mxu0 %v1717
  %1844 = vmatpush.bf16.msra.mxu0 %v1716
  %1845 = vmatmul.bf16.gmra.mxu0 %v236
  %v1846 = vpop.f32.mrf.mxu0
  %v1847 = vadd.f32 %v1818, %v1846
  %v1848 = vpop.f32.mrf.mxu0
  %v1849 = vadd.f32 %v1820, %v1848
  %1850 = vmatmul.bf16.gmra.mxu0 %v243
  %v1851 = vpop.f32.mrf.mxu0
  %v1852 = vadd.f32 %v1823, %v1851
  %v1853 = vpop.f32.mrf.mxu0
  %v1854 = vadd.f32 %v1825, %v1853
  %1855 = vmatmul.bf16.gmra.mxu0 %v250
  %v1856 = vpop.f32.mrf.mxu0
  %v1857 = vadd.f32 %v1828, %v1856
  %v1858 = vpop.f32.mrf.mxu0
  %v1859 = vadd.f32 %v1830, %v1858
  %1860 = vmatmul.bf16.gmra.mxu0 %v257
  %v1861 = vpop.f32.mrf.mxu0
  %v1862 = vadd.f32 %v1833, %v1861
  %v1863 = vpop.f32.mrf.mxu0
  %v1864 = vadd.f32 %v1835, %v1863
  %1865 = vdwg.mxu0
  %1866 = vmatpush.bf16.msra.mxu0 %v1731
  %1867 = vmatpush.bf16.msra.mxu0 %v1730
  %1868 = vmatpush.bf16.msra.mxu0 %v1729
  %1869 = vmatpush.bf16.msra.mxu0 %v1728
  %1870 = vmatpush.bf16.msra.mxu0 %v1727
  %1871 = vmatpush.bf16.msra.mxu0 %v1726
  %1872 = vmatpush.bf16.msra.mxu0 %v1725
  %1873 = vmatpush.bf16.msra.mxu0 %v1724
  %1874 = vmatmul.bf16.gmra.mxu0 %v237
  %v1875 = vpop.f32.mrf.mxu0
  %v1876 = vadd.f32 %v1847, %v1875
  %v1877 = vpop.f32.mrf.mxu0
  %v1878 = vadd.f32 %v1849, %v1877
  %1879 = vmatmul.bf16.gmra.mxu0 %v244
  %v1880 = vpop.f32.mrf.mxu0
  %v1881 = vadd.f32 %v1852, %v1880
  %v1882 = vpop.f32.mrf.mxu0
  %v1883 = vadd.f32 %v1854, %v1882
  %1884 = vmatmul.bf16.gmra.mxu0 %v251
  %v1885 = vpop.f32.mrf.mxu0
  %v1886 = vadd.f32 %v1857, %v1885
  %v1887 = vpop.f32.mrf.mxu0
  %v1888 = vadd.f32 %v1859, %v1887
  %1889 = vmatmul.bf16.gmra.mxu0 %v258
  %v1890 = vpop.f32.mrf.mxu0
  %v1891 = vadd.f32 %v1862, %v1890
  %v1892 = vpop.f32.mrf.mxu0
  %v1893 = vadd.f32 %v1864, %v1892
  %1894 = vdwg.mxu0
  %1895 = vmatpush.bf16.msra.mxu0 %v1739
  %1896 = vmatpush.bf16.msra.mxu0 %v1738
  %1897 = vmatpush.bf16.msra.mxu0 %v1737
  %1898 = vmatpush.bf16.msra.mxu0 %v1736
  %1899 = vmatpush.bf16.msra.mxu0 %v1735
  %1900 = vmatpush.bf16.msra.mxu0 %v1734
  %1901 = vmatpush.bf16.msra.mxu0 %v1733
  %1902 = vmatpush.bf16.msra.mxu0 %v1732
  %1903 = vmatmul.bf16.gmra.mxu0 %v238
  %v1904 = vpop.f32.mrf.mxu0
  %v1905 = vadd.f32 %v1876, %v1904
  %v1906 = vpop.f32.mrf.mxu0
  %v1907 = vadd.f32 %v1878, %v1906
  %1908 = vmatmul.bf16.gmra.mxu0 %v245
  %v1909 = vpop.f32.mrf.mxu0
  %v1910 = vadd.f32 %v1881, %v1909
  %v1911 = vpop.f32.mrf.mxu0
  %v1912 = vadd.f32 %v1883, %v1911
  %1913 = vmatmul.bf16.gmra.mxu0 %v252
  %v1914 = vpop.f32.mrf.mxu0
  %v1915 = vadd.f32 %v1886, %v1914
  %v1916 = vpop.f32.mrf.mxu0
  %v1917 = vadd.f32 %v1888, %v1916
  %1918 = vmatmul.bf16.gmra.mxu0 %v259
  %v1919 = vpop.f32.mrf.mxu0
  %v1920 = vadd.f32 %v1891, %v1919
  %v1921 = vpop.f32.mrf.mxu0
  %v1922 = vadd.f32 %v1893, %v1921
  %1923 = vdwg.mxu0
  %1924 = vmatpush.bf16.msra.mxu0 %v1747
  %1925 = vmatpush.bf16.msra.mxu0 %v1746
  %1926 = vmatpush.bf16.msra.mxu0 %v1745
  %1927 = vmatpush.bf16.msra.mxu0 %v1744
  %1928 = vmatpush.bf16.msra.mxu0 %v1743
  %1929 = vmatpush.bf16.msra.mxu0 %v1742
  %1930 = vmatpush.bf16.msra.mxu0 %v1741
  %1931 = vmatpush.bf16.msra.mxu0 %v1740
  %1932 = vmatmul.bf16.gmra.mxu0 %v239
  %v1933 = vpop.f32.mrf.mxu0
  %v1934 = vadd.f32 %v1905, %v1933
  %v1935 = vpop.f32.mrf.mxu0
  %v1936 = vadd.f32 %v1907, %v1935
  %1937 = vmatmul.bf16.gmra.mxu0 %v246
  %v1938 = vpop.f32.mrf.mxu0
  %v1939 = vadd.f32 %v1910, %v1938
  %v1940 = vpop.f32.mrf.mxu0
  %v1941 = vadd.f32 %v1912, %v1940
  %1942 = vmatmul.bf16.gmra.mxu0 %v253
  %v1943 = vpop.f32.mrf.mxu0
  %v1944 = vadd.f32 %v1915, %v1943
  %v1945 = vpop.f32.mrf.mxu0
  %v1946 = vadd.f32 %v1917, %v1945
  %1947 = vmatmul.bf16.gmra.mxu0 %v260
  %v1948 = vpop.f32.mrf.mxu0
  %v1949 = vadd.f32 %v1920, %v1948
  %v1950 = vpop.f32.mrf.mxu0
  %v1951 = vadd.f32 %v1922, %v1950
  %1952 = vdwg.mxu0
  %1953 = vmatpush.bf16.msra.mxu0 %v1755
  %1954 = vmatpush.bf16.msra.mxu0 %v1754
  %1955 = vmatpush.bf16.msra.mxu0 %v1753
  %1956 = vmatpush.bf16.msra.mxu0 %v1752
  %1957 = vmatpush.bf16.msra.mxu0 %v1751
  %1958 = vmatpush.bf16.msra.mxu0 %v1750
  %1959 = vmatpush.bf16.msra.mxu0 %v1749
  %1960 = vmatpush.bf16.msra.mxu0 %v1748
  %1961 = vmatmul.bf16.gmra.mxu0 %v240
  %v1962 = vpop.f32.mrf.mxu0
  %v1963 = vadd.f32 %v1934, %v1962
  %v1964 = vpop.f32.mrf.mxu0
  %v1965 = vadd.f32 %v1936, %v1964
  %1966 = vmatmul.bf16.gmra.mxu0 %v247
  %v1967 = vpop.f32.mrf.mxu0
  %v1968 = vadd.f32 %v1939, %v1967
  %v1969 = vpop.f32.mrf.mxu0
  %v1970 = vadd.f32 %v1941, %v1969
  %1971 = vmatmul.bf16.gmra.mxu0 %v254
  %v1972 = vpop.f32.mrf.mxu0
  %v1973 = vadd.f32 %v1944, %v1972
  %v1974 = vpop.f32.mrf.mxu0
  %v1975 = vadd.f32 %v1946, %v1974
  %1976 = vmatmul.bf16.gmra.mxu0 %v261
  %v1977 = vpop.f32.mrf.mxu0
  %v1978 = vadd.f32 %v1949, %v1977
  %v1979 = vpop.f32.mrf.mxu0
  %v1980 = vadd.f32 %v1951, %v1979
  %1981 = vdwg.mxu0
  %1982 = vmatpush.bf16.msra.mxu0 0
  %1983 = vmatpush.bf16.msra.mxu0 0
  %1984 = vmatpush.bf16.msra.mxu0 0
  %1985 = vmatpush.bf16.msra.mxu0 0
  %1986 = vmatpush.bf16.msra.mxu0 0
  %1987 = vmatpush.bf16.msra.mxu0 0
  %1988 = vmatpush.bf16.msra.mxu0 %v1757
  %1989 = vmatpush.bf16.msra.mxu0 %v1756
  %1990 = vmatmul.bf16.gmra.mxu0 %v589
  %v1991 = vpop.f32.mrf.mxu0
  %v1992 = vadd.f32 %v1963, %v1991
  %v1993 = vpop.f32.mrf.mxu0
  %v1994 = vadd.f32 %v1965, %v1993
  %1995 = vmatmul.bf16.gmra.mxu0 %v592
  %v1996 = vpop.f32.mrf.mxu0
  %v1997 = vadd.f32 %v1968, %v1996
  %v1998 = vpop.f32.mrf.mxu0
  %v1999 = vadd.f32 %v1970, %v1998
  %2000 = vmatmul.bf16.gmra.mxu0 %v595
  %v2001 = vpop.f32.mrf.mxu0
  %v2002 = vadd.f32 %v1973, %v2001
  %v2003 = vpop.f32.mrf.mxu0
  %v2004 = vadd.f32 %v1975, %v2003
  %2005 = vmatmul.bf16.gmra.mxu0 %v598
  %v2006 = vpop.f32.mrf.mxu0
  %v2007 = vadd.f32 %v1978, %v2006
  %v2008 = vpop.f32.mrf.mxu0
  %v2009 = vadd.f32 %v1980, %v2008
  %2010 = vdwg.mxu0
  %s2011 = scalar_lea.vmem %s2, 1200
  %v2012 = vld [vmem:[%s2011] sm:$0xf]
  %v2013 = vld [vmem:[%s2011 + $0x4] sm:$0xf]
  %v2014 = vld [vmem:[%s2011 + $0x8] sm:$0xf]
  %v2015 = vld [vmem:[%s2011 + $0xc] sm:$0xf]
  %v2016 = vld [vmem:[%s2011 + $0x10] sm:$0xf]
  %v2017 = vld [vmem:[%s2011 + $0x14] sm:$0xf]
  %v2018 = vld [vmem:[%s2011 + $0x18] sm:$0xf]
  %v2019 = vld [vmem:[%s2011 + $0x1c] sm:$0xf]
  %v2020 = vld [vmem:[%s2011 + $0x20] sm:$0xf]
  %v2021 = vld [vmem:[%s2011 + $0x24] sm:$0xf]
  %v2022 = vld [vmem:[%s2011 + $0x28] sm:$0xf]
  %v2023 = vld [vmem:[%s2011 + $0x2c] sm:$0xf]
  %v2024 = vld [vmem:[%s2011 + $0x30] sm:$0xf]
  %v2025 = vld [vmem:[%s2011 + $0x34] sm:$0xf]
  %v2026 = vld [vmem:[%s2011 + $0x38] sm:$0xf]
  %v2027 = vld [vmem:[%s2011 + $0x3c] sm:$0xf]
  %v2028 = vld [vmem:[%s2011 + $0x40] sm:$0xf]
  %v2029 = vld [vmem:[%s2011 + $0x44] sm:$0xf]
  %v2030 = vld [vmem:[%s2011 + $0x48] sm:$0xf]
  %v2031 = vld [vmem:[%s2011 + $0x4c] sm:$0xf]
  %v2032 = vld [vmem:[%s2011 + $0x50] sm:$0xf]
  %v2033 = vld [vmem:[%s2011 + $0x54] sm:$0xf]
  %v2034 = vld [vmem:[%s2011 + $0x58] sm:$0xf]
  %v2035 = vld [vmem:[%s2011 + $0x5c] sm:$0xf]
  %v2036 = vld [vmem:[%s2011 + $0x60] sm:$0xf]
  %v2037 = vld [vmem:[%s2011 + $0x64] sm:$0xf]
  %v2038 = vld [vmem:[%s2011 + $0x68] sm:$0xf]
  %v2039 = vld [vmem:[%s2011 + $0x6c] sm:$0xf]
  %v2040 = vld [vmem:[%s2011 + $0x70] sm:$0xf]
  %v2041 = vld [vmem:[%s2011 + $0x74] sm:$0xf]
  %v2042 = vld [vmem:[%s2011 + $0x78] sm:$0xf]
  %v2043 = vld [vmem:[%s2011 + $0x7c] sm:$0xf]
  %v2044 = vld [vmem:[%s2011 + $0x80] sm:$0xf]
  %v2045 = vld [vmem:[%s2011 + $0x84] sm:$0xf]
  %v2046 = vld [vmem:[%s2011 + $0x88] sm:$0xf]
  %v2047 = vld [vmem:[%s2011 + $0x8c] sm:$0xf]
  %v2048 = vld [vmem:[%s2011 + $0x90] sm:$0xf]
  %v2049 = vld [vmem:[%s2011 + $0x94] sm:$0xf]
  %v2050 = vld [vmem:[%s2011 + $0x98] sm:$0xf]
  %v2051 = vld [vmem:[%s2011 + $0x9c] sm:$0xf]
  %v2052 = vld [vmem:[%s2011 + $0xa0] sm:$0xf]
  %v2053 = vld [vmem:[%s2011 + $0xa4] sm:$0xf]
  %v2054 = vld [vmem:[%s2011 + $0xa8] sm:$0xf]
  %v2055 = vld [vmem:[%s2011 + $0xac] sm:$0xf]
  %v2056 = vld [vmem:[%s2011 + $0xb0] sm:$0xf]
  %v2057 = vld [vmem:[%s2011 + $0xb4] sm:$0xf]
  %v2058 = vld [vmem:[%s2011 + $0xb8] sm:$0xf]
  %v2059 = vld [vmem:[%s2011 + $0xbc] sm:$0xf]
  %v2060 = vld [vmem:[%s2011 + $0xc0] sm:$0xf]
  %v2061 = vld [vmem:[%s2011 + $0xc4] sm:$0xf]
  %v2062 = vld [vmem:[%s2011 + $0xc8] sm:$0xf]
  %v2063 = vld [vmem:[%s2011 + $0xcc] sm:$0xf]
  %v2064 = vld [vmem:[%s2011 + $0xd0] sm:$0xf]
  %v2065 = vld [vmem:[%s2011 + $0xd4] sm:$0xf]
  %v2066 = vld [vmem:[%s2011 + $0xd8] sm:$0xf]
  %v2067 = vld [vmem:[%s2011 + $0xdc] sm:$0xf]
  %v2068 = vld [vmem:[%s2011 + $0xe0] sm:$0xf]
  %v2069 = vld [vmem:[%s2011 + $0xe4] sm:$0xf]
  %v2070 = vld [vmem:[%s2011 + $0xe8] sm:$0xf]
  %v2071 = vld [vmem:[%s2011 + $0xec] sm:$0xf]
  %v2072 = vld [vmem:[%s2011 + $0xf0] sm:$0xf]
  %v2073 = vld [vmem:[%s2011 + $0xf4] sm:$0xf]
  %v2074 = vld [vmem:[%s2011 + $0xf8] sm:$0xf]
  %v2075 = vld [vmem:[%s2011 + $0xfc] sm:$0xf]
  %v2076 = vld [vmem:[%s2011 + $0x100] sm:$0xf]
  %v2077 = vld [vmem:[%s2011 + $0x104] sm:$0xf]
  %v2078 = vld [vmem:[%s2011 + $0x108] sm:$0xf]
  %v2079 = vld [vmem:[%s2011 + $0x10c] sm:$0xf]
  %v2080 = vld [vmem:[%s2011 + $0x110] sm:$0xf]
  %v2081 = vld [vmem:[%s2011 + $0x114] sm:$0xf]
  %v2082 = vld [vmem:[%s2011 + $0x118] sm:$0xf]
  %v2083 = vld [vmem:[%s2011 + $0x11c] sm:$0xf]
  %v2084 = vld [vmem:[%s2011 + $0x120] sm:$0xf]
  %v2085 = vld [vmem:[%s2011 + $0x124] sm:$0xf]
  %v2086 = vld [vmem:[%s2011 + $0x128] sm:$0xf]
  %v2087 = vld [vmem:[%s2011 + $0x12c] sm:$0xf]
  %v2088 = vld [vmem:[%s2011 + $0x130] sm:$0xf]
  %v2089 = vld [vmem:[%s2011 + $0x134] sm:$0xf]
  %v2090 = vld [vmem:[%s2011 + $0x138] sm:$0xf]
  %v2091 = vld [vmem:[%s2011 + $0x13c] sm:$0xf]
  %v2092 = vld [vmem:[%s2011 + $0x140] sm:$0xf]
  %v2093 = vld [vmem:[%s2011 + $0x144] sm:$0xf]
  %v2094 = vld [vmem:[%s2011 + $0x148] sm:$0xf]
  %v2095 = vld [vmem:[%s2011 + $0x14c] sm:$0xf]
  %v2096 = vld [vmem:[%s2011 + $0x150] sm:$0xf]
  %v2097 = vld [vmem:[%s2011 + $0x154] sm:$0xf]
  %v2098 = vld [vmem:[%s2011 + $0x158] sm:$0xf]
  %v2099 = vld [vmem:[%s2011 + $0x15c] sm:$0xf]
  %v2100 = vld [vmem:[%s2011 + $0x160] sm:$0xf]
  %v2101 = vld [vmem:[%s2011 + $0x164] sm:$0xf]
  %v2102 = vld [vmem:[%s2011 + $0x168] sm:$0xf]
  %v2103 = vld [vmem:[%s2011 + $0x16c] sm:$0xf]
  %v2104 = vld [vmem:[%s2011 + $0x170] sm:$0xf]
  %v2105 = vld [vmem:[%s2011 + $0x174] sm:$0xf]
  %v2106 = vld [vmem:[%s2011 + $0x178] sm:$0xf]
  %v2107 = vld [vmem:[%s2011 + $0x17c] sm:$0xf]
  %v2108 = vld [vmem:[%s2011 + $0x180] sm:$0xf]
  %v2109 = vld [vmem:[%s2011 + $0x184] sm:$0xf]
  %v2110 = vld [vmem:[%s2011 + $0x188] sm:$0xf]
  %v2111 = vld [vmem:[%s2011 + $0x18c] sm:$0xf]
  %v2212 = vunpack.c.l.b16 %v2012
  %v2213 = vunpack.c.l.b16 %v2013
  %v2214 = vunpack.c.l.b16 %v2014
  %v2215 = vunpack.c.l.b16 %v2015
  %v2216 = vunpack.c.l.b16 %v2016
  %v2217 = vunpack.c.l.b16 %v2017
  %v2218 = vunpack.c.l.b16 %v2018
  %v2219 = vunpack.c.l.b16 %v2019
  %v2220 = vunpack.c.l.b16 %v2020
  %v2221 = vunpack.c.l.b16 %v2021
  %v2222 = vunpack.c.l.b16 %v2022
  %v2223 = vunpack.c.l.b16 %v2023
  %v2224 = vunpack.c.l.b16 %v2024
  %v2225 = vunpack.c.l.b16 %v2025
  %v2226 = vunpack.c.l.b16 %v2026
  %v2227 = vunpack.c.l.b16 %v2027
  %v2228 = vunpack.c.l.b16 %v2028
  %v2229 = vunpack.c.l.b16 %v2029
  %v2230 = vunpack.c.l.b16 %v2030
  %v2231 = vunpack.c.l.b16 %v2031
  %v2232 = vunpack.c.l.b16 %v2032
  %v2233 = vunpack.c.l.b16 %v2033
  %v2234 = vunpack.c.l.b16 %v2034
  %v2235 = vunpack.c.l.b16 %v2035
  %v2236 = vunpack.c.l.b16 %v2036
  %v2237 = vunpack.c.l.b16 %v2037
  %v2238 = vunpack.c.l.b16 %v2038
  %v2239 = vunpack.c.l.b16 %v2039
  %v2240 = vunpack.c.l.b16 %v2040
  %v2241 = vunpack.c.l.b16 %v2041
  %v2242 = vunpack.c.l.b16 %v2042
  %v2243 = vunpack.c.l.b16 %v2043
  %v2244 = vunpack.c.l.b16 %v2044
  %v2245 = vunpack.c.l.b16 %v2045
  %v2246 = vunpack.c.l.b16 %v2046
  %v2247 = vunpack.c.l.b16 %v2047
  %v2248 = vunpack.c.l.b16 %v2048
  %v2249 = vunpack.c.l.b16 %v2049
  %v2250 = vunpack.c.l.b16 %v2050
  %v2251 = vunpack.c.l.b16 %v2051
  %v2252 = vunpack.c.l.b16 %v2052
  %v2253 = vunpack.c.l.b16 %v2053
  %v2254 = vunpack.c.l.b16 %v2054
  %v2255 = vunpack.c.l.b16 %v2055
  %v2256 = vunpack.c.l.b16 %v2056
  %v2257 = vunpack.c.l.b16 %v2057
  %v2258 = vunpack.c.l.b16 %v2058
  %v2259 = vunpack.c.l.b16 %v2059
  %v2260 = vunpack.c.l.b16 %v2060
  %v2261 = vunpack.c.l.b16 %v2061
  %v2262 = vunpack.c.l.b16 %v2062
  %v2263 = vunpack.c.l.b16 %v2063
  %v2264 = vunpack.c.l.b16 %v2064
  %v2265 = vunpack.c.l.b16 %v2065
  %v2266 = vunpack.c.l.b16 %v2066
  %v2267 = vunpack.c.l.b16 %v2067
  %v2268 = vunpack.c.l.b16 %v2068
  %v2269 = vunpack.c.l.b16 %v2069
  %v2270 = vunpack.c.l.b16 %v2070
  %v2271 = vunpack.c.l.b16 %v2071
  %v2272 = vunpack.c.l.b16 %v2072
  %v2273 = vunpack.c.l.b16 %v2073
  %v2274 = vunpack.c.l.b16 %v2074
  %v2275 = vunpack.c.l.b16 %v2075
  %v2276 = vunpack.c.l.b16 %v2076
  %v2277 = vunpack.c.l.b16 %v2077
  %v2278 = vunpack.c.l.b16 %v2078
  %v2279 = vunpack.c.l.b16 %v2079
  %v2280 = vunpack.c.l.b16 %v2080
  %v2281 = vunpack.c.l.b16 %v2081
  %v2282 = vunpack.c.l.b16 %v2082
  %v2283 = vunpack.c.l.b16 %v2083
  %v2284 = vunpack.c.l.b16 %v2084
  %v2285 = vunpack.c.l.b16 %v2085
  %v2286 = vunpack.c.l.b16 %v2086
  %v2287 = vunpack.c.l.b16 %v2087
  %v2288 = vunpack.c.l.b16 %v2088
  %v2289 = vunpack.c.l.b16 %v2089
  %v2290 = vunpack.c.l.b16 %v2090
  %v2291 = vunpack.c.l.b16 %v2091
  %v2292 = vunpack.c.l.b16 %v2092
  %v2293 = vunpack.c.l.b16 %v2093
  %v2294 = vunpack.c.l.b16 %v2094
  %v2295 = vunpack.c.l.b16 %v2095
  %v2296 = vunpack.c.l.b16 %v2096
  %v2297 = vunpack.c.l.b16 %v2097
  %v2298 = vunpack.c.l.b16 %v2098
  %v2299 = vunpack.c.l.b16 %v2099
  %v2300 = vunpack.c.l.b16 %v2100
  %v2301 = vunpack.c.l.b16 %v2101
  %v2302 = vunpack.c.l.b16 %v2102
  %v2303 = vunpack.c.l.b16 %v2103
  %v2304 = vunpack.c.l.b16 %v2104
  %v2305 = vunpack.c.l.b16 %v2105
  %v2306 = vunpack.c.l.b16 %v2106
  %v2307 = vunpack.c.l.b16 %v2107
  %v2308 = vunpack.c.l.b16 %v2108
  %v2309 = vunpack.c.l.b16 %v2109
  %v2310 = vunpack.c.l.b16 %v2110
  %v2311 = vunpack.c.l.b16 %v2111
  %v2312 = vpack.c.b16 %v2213, %v2212
  %v2313 = vpack.c.b16 %v2215, %v2214
  %v2314 = vpack.c.b16 %v2217, %v2216
  %v2315 = vpack.c.b16 %v2219, %v2218
  %v2316 = vpack.c.b16 %v2221, %v2220
  %v2317 = vpack.c.b16 %v2223, %v2222
  %v2318 = vpack.c.b16 %v2225, %v2224
  %v2319 = vpack.c.b16 %v2227, %v2226
  %v2320 = vpack.c.b16 %v2229, %v2228
  %v2321 = vpack.c.b16 %v2231, %v2230
  %v2322 = vpack.c.b16 %v2233, %v2232
  %v2323 = vpack.c.b16 %v2235, %v2234
  %v2324 = vpack.c.b16 %v2237, %v2236
  %v2325 = vpack.c.b16 %v2239, %v2238
  %v2326 = vpack.c.b16 %v2241, %v2240
  %v2327 = vpack.c.b16 %v2243, %v2242
  %v2328 = vpack.c.b16 %v2245, %v2244
  %v2329 = vpack.c.b16 %v2247, %v2246
  %v2330 = vpack.c.b16 %v2249, %v2248
  %v2331 = vpack.c.b16 %v2251, %v2250
  %v2332 = vpack.c.b16 %v2253, %v2252
  %v2333 = vpack.c.b16 %v2255, %v2254
  %v2334 = vpack.c.b16 %v2257, %v2256
  %v2335 = vpack.c.b16 %v2259, %v2258
  %v2336 = vpack.c.b16 %v2261, %v2260
  %v2337 = vpack.c.b16 %v2263, %v2262
  %v2338 = vpack.c.b16 %v2265, %v2264
  %v2339 = vpack.c.b16 %v2267, %v2266
  %v2340 = vpack.c.b16 %v2269, %v2268
  %v2341 = vpack.c.b16 %v2271, %v2270
  %v2342 = vpack.c.b16 %v2273, %v2272
  %v2343 = vpack.c.b16 %v2275, %v2274
  %v2344 = vpack.c.b16 %v2277, %v2276
  %v2345 = vpack.c.b16 %v2279, %v2278
  %v2346 = vpack.c.b16 %v2281, %v2280
  %v2347 = vpack.c.b16 %v2283, %v2282
  %v2348 = vpack.c.b16 %v2285, %v2284
  %v2349 = vpack.c.b16 %v2287, %v2286
  %v2350 = vpack.c.b16 %v2289, %v2288
  %v2351 = vpack.c.b16 %v2291, %v2290
  %v2352 = vpack.c.b16 %v2293, %v2292
  %v2353 = vpack.c.b16 %v2295, %v2294
  %v2354 = vpack.c.b16 %v2297, %v2296
  %v2355 = vpack.c.b16 %v2299, %v2298
  %v2356 = vpack.c.b16 %v2301, %v2300
  %v2357 = vpack.c.b16 %v2303, %v2302
  %v2358 = vpack.c.b16 %v2305, %v2304
  %v2359 = vpack.c.b16 %v2307, %v2306
  %v2360 = vpack.c.b16 %v2309, %v2308
  %v2361 = vpack.c.b16 %v2311, %v2310
  %2412 = vmatpush.bf16.msra.mxu0 %v2319
  %2413 = vmatpush.bf16.msra.mxu0 %v2318
  %2414 = vmatpush.bf16.msra.mxu0 %v2317
  %2415 = vmatpush.bf16.msra.mxu0 %v2316
  %2416 = vmatpush.bf16.msra.mxu0 %v2315
  %2417 = vmatpush.bf16.msra.mxu0 %v2314
  %2418 = vmatpush.bf16.msra.mxu0 %v2313
  %2419 = vmatpush.bf16.msra.mxu0 %v2312
  %2420 = vmatmul.bf16.gmra.mxu0 %v235
  %v2421 = vpop.f32.mrf.mxu0
  %v2422 = vadd.f32 0.0, %v2421
  %v2423 = vpop.f32.mrf.mxu0
  %v2424 = vadd.f32 0.0, %v2423
  %2425 = vmatmul.bf16.gmra.mxu0 %v242
  %v2426 = vpop.f32.mrf.mxu0
  %v2427 = vadd.f32 0.0, %v2426
  %v2428 = vpop.f32.mrf.mxu0
  %v2429 = vadd.f32 0.0, %v2428
  %2430 = vmatmul.bf16.gmra.mxu0 %v249
  %v2431 = vpop.f32.mrf.mxu0
  %v2432 = vadd.f32 0.0, %v2431
  %v2433 = vpop.f32.mrf.mxu0
  %v2434 = vadd.f32 0.0, %v2433
  %2435 = vmatmul.bf16.gmra.mxu0 %v256
  %v2436 = vpop.f32.mrf.mxu0
  %v2437 = vadd.f32 0.0, %v2436
  %v2438 = vpop.f32.mrf.mxu0
  %v2439 = vadd.f32 0.0, %v2438
  %2440 = vdwg.mxu0
  %2441 = vmatpush.bf16.msra.mxu0 %v2327
  %2442 = vmatpush.bf16.msra.mxu0 %v2326
  %2443 = vmatpush.bf16.msra.mxu0 %v2325
  %2444 = vmatpush.bf16.msra.mxu0 %v2324
  %2445 = vmatpush.bf16.msra.mxu0 %v2323
  %2446 = vmatpush.bf16.msra.mxu0 %v2322
  %2447 = vmatpush.bf16.msra.mxu0 %v2321
  %2448 = vmatpush.bf16.msra.mxu0 %v2320
  %2449 = vmatmul.bf16.gmra.mxu0 %v236
  %v2450 = vpop.f32.mrf.mxu0
  %v2451 = vadd.f32 %v2422, %v2450
  %v2452 = vpop.f32.mrf.mxu0
  %v2453 = vadd.f32 %v2424, %v2452
  %2454 = vmatmul.bf16.gmra.mxu0 %v243
  %v2455 = vpop.f32.mrf.mxu0
  %v2456 = vadd.f32 %v2427, %v2455
  %v2457 = vpop.f32.mrf.mxu0
  %v2458 = vadd.f32 %v2429, %v2457
  %2459 = vmatmul.bf16.gmra.mxu0 %v250
  %v2460 = vpop.f32.mrf.mxu0
  %v2461 = vadd.f32 %v2432, %v2460
  %v2462 = vpop.f32.mrf.mxu0
  %v2463 = vadd.f32 %v2434, %v2462
  %2464 = vmatmul.bf16.gmra.mxu0 %v257
  %v2465 = vpop.f32.mrf.mxu0
  %v2466 = vadd.f32 %v2437, %v2465
  %v2467 = vpop.f32.mrf.mxu0
  %v2468 = vadd.f32 %v2439, %v2467
  %2469 = vdwg.mxu0
  %2470 = vmatpush.bf16.msra.mxu0 %v2335
  %2471 = vmatpush.bf16.msra.mxu0 %v2334
  %2472 = vmatpush.bf16.msra.mxu0 %v2333
  %2473 = vmatpush.bf16.msra.mxu0 %v2332
  %2474 = vmatpush.bf16.msra.mxu0 %v2331
  %2475 = vmatpush.bf16.msra.mxu0 %v2330
  %2476 = vmatpush.bf16.msra.mxu0 %v2329
  %2477 = vmatpush.bf16.msra.mxu0 %v2328
  %2478 = vmatmul.bf16.gmra.mxu0 %v237
  %v2479 = vpop.f32.mrf.mxu0
  %v2480 = vadd.f32 %v2451, %v2479
  %v2481 = vpop.f32.mrf.mxu0
  %v2482 = vadd.f32 %v2453, %v2481
  %2483 = vmatmul.bf16.gmra.mxu0 %v244
  %v2484 = vpop.f32.mrf.mxu0
  %v2485 = vadd.f32 %v2456, %v2484
  %v2486 = vpop.f32.mrf.mxu0
  %v2487 = vadd.f32 %v2458, %v2486
  %2488 = vmatmul.bf16.gmra.mxu0 %v251
  %v2489 = vpop.f32.mrf.mxu0
  %v2490 = vadd.f32 %v2461, %v2489
  %v2491 = vpop.f32.mrf.mxu0
  %v2492 = vadd.f32 %v2463, %v2491
  %2493 = vmatmul.bf16.gmra.mxu0 %v258
  %v2494 = vpop.f32.mrf.mxu0
  %v2495 = vadd.f32 %v2466, %v2494
  %v2496 = vpop.f32.mrf.mxu0
  %v2497 = vadd.f32 %v2468, %v2496
  %2498 = vdwg.mxu0
  %2499 = vmatpush.bf16.msra.mxu0 %v2343
  %2500 = vmatpush.bf16.msra.mxu0 %v2342
  %2501 = vmatpush.bf16.msra.mxu0 %v2341
  %2502 = vmatpush.bf16.msra.mxu0 %v2340
  %2503 = vmatpush.bf16.msra.mxu0 %v2339
  %2504 = vmatpush.bf16.msra.mxu0 %v2338
  %2505 = vmatpush.bf16.msra.mxu0 %v2337
  %2506 = vmatpush.bf16.msra.mxu0 %v2336
  %2507 = vmatmul.bf16.gmra.mxu0 %v238
  %v2508 = vpop.f32.mrf.mxu0
  %v2509 = vadd.f32 %v2480, %v2508
  %v2510 = vpop.f32.mrf.mxu0
  %v2511 = vadd.f32 %v2482, %v2510
  %2512 = vmatmul.bf16.gmra.mxu0 %v245
  %v2513 = vpop.f32.mrf.mxu0
  %v2514 = vadd.f32 %v2485, %v2513
  %v2515 = vpop.f32.mrf.mxu0
  %v2516 = vadd.f32 %v2487, %v2515
  %2517 = vmatmul.bf16.gmra.mxu0 %v252
  %v2518 = vpop.f32.mrf.mxu0
  %v2519 = vadd.f32 %v2490, %v2518
  %v2520 = vpop.f32.mrf.mxu0
  %v2521 = vadd.f32 %v2492, %v2520
  %2522 = vmatmul.bf16.gmra.mxu0 %v259
  %v2523 = vpop.f32.mrf.mxu0
  %v2524 = vadd.f32 %v2495, %v2523
  %v2525 = vpop.f32.mrf.mxu0
  %v2526 = vadd.f32 %v2497, %v2525
  %2527 = vdwg.mxu0
  %2528 = vmatpush.bf16.msra.mxu0 %v2351
  %2529 = vmatpush.bf16.msra.mxu0 %v2350
  %2530 = vmatpush.bf16.msra.mxu0 %v2349
  %2531 = vmatpush.bf16.msra.mxu0 %v2348
  %2532 = vmatpush.bf16.msra.mxu0 %v2347
  %2533 = vmatpush.bf16.msra.mxu0 %v2346
  %2534 = vmatpush.bf16.msra.mxu0 %v2345
  %2535 = vmatpush.bf16.msra.mxu0 %v2344
  %2536 = vmatmul.bf16.gmra.mxu0 %v239
  %v2537 = vpop.f32.mrf.mxu0
  %v2538 = vadd.f32 %v2509, %v2537
  %v2539 = vpop.f32.mrf.mxu0
  %v2540 = vadd.f32 %v2511, %v2539
  %2541 = vmatmul.bf16.gmra.mxu0 %v246
  %v2542 = vpop.f32.mrf.mxu0
  %v2543 = vadd.f32 %v2514, %v2542
  %v2544 = vpop.f32.mrf.mxu0
  %v2545 = vadd.f32 %v2516, %v2544
  %2546 = vmatmul.bf16.gmra.mxu0 %v253
  %v2547 = vpop.f32.mrf.mxu0
  %v2548 = vadd.f32 %v2519, %v2547
  %v2549 = vpop.f32.mrf.mxu0
  %v2550 = vadd.f32 %v2521, %v2549
  %2551 = vmatmul.bf16.gmra.mxu0 %v260
  %v2552 = vpop.f32.mrf.mxu0
  %v2553 = vadd.f32 %v2524, %v2552
  %v2554 = vpop.f32.mrf.mxu0
  %v2555 = vadd.f32 %v2526, %v2554
  %2556 = vdwg.mxu0
  %2557 = vmatpush.bf16.msra.mxu0 %v2359
  %2558 = vmatpush.bf16.msra.mxu0 %v2358
  %2559 = vmatpush.bf16.msra.mxu0 %v2357
  %2560 = vmatpush.bf16.msra.mxu0 %v2356
  %2561 = vmatpush.bf16.msra.mxu0 %v2355
  %2562 = vmatpush.bf16.msra.mxu0 %v2354
  %2563 = vmatpush.bf16.msra.mxu0 %v2353
  %2564 = vmatpush.bf16.msra.mxu0 %v2352
  %2565 = vmatmul.bf16.gmra.mxu0 %v240
  %v2566 = vpop.f32.mrf.mxu0
  %v2567 = vadd.f32 %v2538, %v2566
  %v2568 = vpop.f32.mrf.mxu0
  %v2569 = vadd.f32 %v2540, %v2568
  %2570 = vmatmul.bf16.gmra.mxu0 %v247
  %v2571 = vpop.f32.mrf.mxu0
  %v2572 = vadd.f32 %v2543, %v2571
  %v2573 = vpop.f32.mrf.mxu0
  %v2574 = vadd.f32 %v2545, %v2573
  %2575 = vmatmul.bf16.gmra.mxu0 %v254
  %v2576 = vpop.f32.mrf.mxu0
  %v2577 = vadd.f32 %v2548, %v2576
  %v2578 = vpop.f32.mrf.mxu0
  %v2579 = vadd.f32 %v2550, %v2578
  %2580 = vmatmul.bf16.gmra.mxu0 %v261
  %v2581 = vpop.f32.mrf.mxu0
  %v2582 = vadd.f32 %v2553, %v2581
  %v2583 = vpop.f32.mrf.mxu0
  %v2584 = vadd.f32 %v2555, %v2583
  %2585 = vdwg.mxu0
  %2586 = vmatpush.bf16.msra.mxu0 0
  %2587 = vmatpush.bf16.msra.mxu0 0
  %2588 = vmatpush.bf16.msra.mxu0 0
  %2589 = vmatpush.bf16.msra.mxu0 0
  %2590 = vmatpush.bf16.msra.mxu0 0
  %2591 = vmatpush.bf16.msra.mxu0 0
  %2592 = vmatpush.bf16.msra.mxu0 %v2361
  %2593 = vmatpush.bf16.msra.mxu0 %v2360
  %2594 = vmatmul.bf16.gmra.mxu0 %v589
  %v2595 = vpop.f32.mrf.mxu0
  %v2596 = vadd.f32 %v2567, %v2595
  %v2597 = vpop.f32.mrf.mxu0
  %v2598 = vadd.f32 %v2569, %v2597
  %2599 = vmatmul.bf16.gmra.mxu0 %v592
  %v2600 = vpop.f32.mrf.mxu0
  %v2601 = vadd.f32 %v2572, %v2600
  %v2602 = vpop.f32.mrf.mxu0
  %v2603 = vadd.f32 %v2574, %v2602
  %2604 = vmatmul.bf16.gmra.mxu0 %v595
  %v2605 = vpop.f32.mrf.mxu0
  %v2606 = vadd.f32 %v2577, %v2605
  %v2607 = vpop.f32.mrf.mxu0
  %v2608 = vadd.f32 %v2579, %v2607
  %2609 = vmatmul.bf16.gmra.mxu0 %v598
  %v2610 = vpop.f32.mrf.mxu0
  %v2611 = vadd.f32 %v2582, %v2610
  %v2612 = vpop.f32.mrf.mxu0
  %v2613 = vadd.f32 %v2584, %v2612
  %2614 = vdwg.mxu0
  %v2615 = vmax.f32 %v784, %v1388
  %v2616 = vmax.f32 %v786, %v1390
  %v2617 = vmax.f32 %v789, %v1393
  %v2618 = vmax.f32 %v791, %v1395
  %v2619 = vmax.f32 %v794, %v1398
  %v2620 = vmax.f32 %v796, %v1400
  %v2621 = vmax.f32 %v799, %v1403
  %v2622 = vmax.f32 %v801, %v1405
  %v2623 = vmax.f32 %v1992, %v2596
  %v2624 = vmax.f32 %v1994, %v2598
  %v2625 = vmax.f32 %v1997, %v2601
  %v2626 = vmax.f32 %v1999, %v2603
  %v2627 = vmax.f32 %v2002, %v2606
  %v2628 = vmax.f32 %v2004, %v2608
  %v2629 = vmax.f32 %v2007, %v2611
  %v2630 = vmax.f32 %v2009, %v2613
  %v2631 = vmax.f32 %v2615, %v2623
  %v2632 = vmax.f32 %v2616, %v2624
  %v2633 = vmax.f32 %v2617, %v2625
  %v2634 = vmax.f32 %v2618, %v2626
  %v2635 = vmax.f32 %v2619, %v2627
  %v2636 = vmax.f32 %v2620, %v2628
  %v2637 = vmax.f32 %v2621, %v2629
  %v2638 = vmax.f32 %v2622, %v2630
  %v2639 = vld [vmem:[%s1] sm:$0xff]
  %v2640 = vld [vmem:[%s1 + $0x8] sm:$0xff]
  %v2641 = vld [vmem:[%s1 + $0x10] sm:$0xff]
  %v2642 = vld [vmem:[%s1 + $0x18] sm:$0xff]
  %v2643 = vld [vmem:[%s1 + $0x20] sm:$0xff]
  %v2644 = vld [vmem:[%s1 + $0x28] sm:$0xff]
  %v2645 = vld [vmem:[%s1 + $0x30] sm:$0xff]
  %v2646 = vld [vmem:[%s1 + $0x38] sm:$0xff]
  %2648 = vset.pattern.permute.xlu0 0
  %2649 = vperm.xlu0 %2648, %v2639
  %v2650 = vpop.permute.xlu0 %2649
  %2653 = vset.pattern.permute.xlu0 0
  %2654 = vperm.xlu0 %2653, %v2640
  %v2655 = vpop.permute.xlu0 %2654
  %2658 = vset.pattern.permute.xlu0 0
  %2659 = vperm.xlu0 %2658, %v2641
  %v2660 = vpop.permute.xlu0 %2659
  %2663 = vset.pattern.permute.xlu0 0
  %2664 = vperm.xlu0 %2663, %v2642
  %v2665 = vpop.permute.xlu0 %2664
  %2668 = vset.pattern.permute.xlu0 0
  %2669 = vperm.xlu0 %2668, %v2643
  %v2670 = vpop.permute.xlu0 %2669
  %2673 = vset.pattern.permute.xlu0 0
  %2674 = vperm.xlu0 %2673, %v2644
  %v2675 = vpop.permute.xlu0 %2674
  %2678 = vset.pattern.permute.xlu0 0
  %2679 = vperm.xlu0 %2678, %v2645
  %v2680 = vpop.permute.xlu0 %2679
  %2683 = vset.pattern.permute.xlu0 0
  %2684 = vperm.xlu0 %2683, %v2646
  %v2685 = vpop.permute.xlu0 %2684
  %v2687 = vadd.f32 %v2631, %v2650
  %v2688 = vadd.f32 %v2632, %v2655
  %v2689 = vadd.f32 %v2633, %v2660
  %v2690 = vadd.f32 %v2634, %v2665
  %v2691 = vadd.f32 %v2635, %v2670
  %v2692 = vadd.f32 %v2636, %v2675
  %v2693 = vadd.f32 %v2637, %v2680
  %v2694 = vadd.f32 %v2638, %v2685
  %v2695 = vmax.f32 %v2687, 0.0
  %v2696 = vmax.f32 %v2688, 0.0
  %v2697 = vmax.f32 %v2689, 0.0
  %v2698 = vmax.f32 %v2690, 0.0
  %v2699 = vmax.f32 %v2691, 0.0
  %v2700 = vmax.f32 %v2692, 0.0
  %v2701 = vmax.f32 %v2693, 0.0
  %v2702 = vmax.f32 %v2694, 0.0
  %v2703 = vpack.c.bf16 %v2695, %v2695
  %v2704 = vpack.c.bf16 %v2696, %v2696
  %v2705 = vpack.c.bf16 %v2697, %v2697
  %v2706 = vpack.c.bf16 %v2698, %v2698
  %v2707 = vpack.c.bf16 %v2699, %v2699
  %v2708 = vpack.c.bf16 %v2700, %v2700
  %v2709 = vpack.c.bf16 %v2701, %v2701
  %v2710 = vpack.c.bf16 %v2702, %v2702
  %vm2711 = vcmask 257024
  %2712 = vst.msk [vmem:[%s3] sm:$0xf] %vm2711, %v2703
  %2713 = vst.msk [vmem:[%s3 + $0x4] sm:$0xf] %vm2711, %v2704
  %2714 = vst.msk [vmem:[%s3 + $0x8] sm:$0xf] %vm2711, %v2705
  %2715 = vst.msk [vmem:[%s3 + $0xc] sm:$0xf] %vm2711, %v2706
  %2716 = vst.msk [vmem:[%s3 + $0x10] sm:$0xf] %vm2711, %v2707
  %2717 = vst.msk [vmem:[%s3 + $0x14] sm:$0xf] %vm2711, %v2708
  %2718 = vst.msk [vmem:[%s3 + $0x18] sm:$0xf] %vm2711, %v2709
  %2719 = vst.msk [vmem:[%s3 + $0x1c] sm:$0xf] %vm2711, %v2710
  // Predicated region
  $region14: #{cnn_mnist2_forward.3} parent=0 // pred_check
    _
  $region15: #{cnn_mnist2_forward.3} parent=0 // pred_check_branch
    %2721 = sbr.rel (0) target = $region17
  $region16: #{cnn_mnist2_forward.3} parent=0 // pred_region
    _
  $region17: #{cnn_mnist2_forward.3} parent=0 // pred_fallthru
    _
  // Predicated region
  $region18: #{cnn_mnist2_forward.3} parent=0 // pred_check
    _
  $region19: #{cnn_mnist2_forward.3} parent=0 // pred_check_branch
    %2723 = sbr.rel (0) target = $region21
  $region20: #{cnn_mnist2_forward.3} parent=0 // pred_region
    _
  $region21: #{cnn_mnist2_forward.3} parent=0 // pred_fallthru
    _

</llo_original>
